<compile_context>
chip_gen: v6e
topology: v6e:2x2x1
jax: 0.10.0
libtpu: 0.0.40
codegen_flags: <defaults>
</compile_context>

<pallas_src>
import math
import numpy as np
import jax
import jax.numpy as jnp
from jax.experimental import pallas as pl
from jax.experimental.pallas import tpu as pltpu

# ---------------- config (small, consistent with the module) ----------------
B = 16            # batch
LATENT = 16       # latent_dim
EMB = 32          # emb_dim
HID = 64          # hidden_dim (MLP inner)
NUM_HEADS = 4
NUM_GROUPS = 4    # reference GQA einsum requires qdim == kvdim  => heads == groups
NUM_BLOCKS = 2
EPS = 1e-5        # torch.nn.LayerNorm default

assert NUM_HEADS == NUM_GROUPS, "reference GQA einsum only type-checks when heads == groups"


def _round8(n):
    return ((n + 7) // 8) * 8


def _build_layout():
    """Row layouts for the three packed parameter buffers (by lane width)."""
    lay32, lay64, lay16 = {}, {}, {}

    def add(lay, name, rows, cur):
        lay[name] = (cur, rows)
        return cur + _round8(rows)          # keep every segment sublane-aligned

    r32 = r64 = r16 = 0
    r32 = add(lay32, "w_in", LATENT, r32)   # (LATENT, EMB)
    r32 = add(lay32, "w_t", 1, r32)         # (1, EMB)
    r32 = add(lay32, "b_in", 1, r32)
    r32 = add(lay32, "b_t", 1, r32)
    for blk in range(NUM_BLOCKS):
        r32 = add(lay32, f"wv{blk}", EMB, r32)    # (EMB, EMB)
        r32 = add(lay32, f"bv{blk}", 1, r32)
        r32 = add(lay32, f"wo{blk}", EMB, r32)    # (EMB, EMB)
        r32 = add(lay32, f"bo{blk}", 1, r32)
        r32 = add(lay32, f"w2{blk}", HID, r32)    # (HID, EMB)
        r32 = add(lay32, f"b2{blk}", 1, r32)
        r32 = add(lay32, f"g1{blk}", 1, r32)
        r32 = add(lay32, f"be1{blk}", 1, r32)
        r32 = add(lay32, f"g2{blk}", 1, r32)
        r32 = add(lay32, f"be2{blk}", 1, r32)
        r64 = add(lay64, f"w1{blk}", EMB, r64)    # (EMB, HID)
        r64 = add(lay64, f"b1{blk}", 1, r64)
    r16 = add(lay16, "w_out", EMB, r16)           # (EMB, LATENT)
    r16 = add(lay16, "b_out", 1, r16)
    return lay32, r32, lay64, r64, lay16, r16


P32_LAYOUT, P32_ROWS, P64_LAYOUT, P64_ROWS, P16_LAYOUT, P16_ROWS = _build_layout()


def _layernorm(x, gamma, beta):
    mu = jnp.mean(x, axis=-1, keepdims=True)
    var = jnp.mean(jnp.square(x - mu), axis=-1, keepdims=True)
    return (x - mu) * jax.lax.rsqrt(var + EPS) * gamma + beta


def dit_kernel(latents_ref, t_ref, p32_ref, p64_ref, p16_ref, out_ref):
    f32 = jnp.float32

    def g32(name):
        off, rows = P32_LAYOUT[name]
        return p32_ref[off:off + rows, :]

    def g64(name):
        off, rows = P64_LAYOUT[name]
        return p64_ref[off:off + rows, :]

    def g16(name):
        off, rows = P16_LAYOUT[name]
        return p16_ref[off:off + rows, :]

    x0 = latents_ref[...]                    # (B, LATENT)
    t = t_ref[...]                           # (B, 1)

    # time embedding: nn.Linear(1, EMB) == t * W^T + b   (K == 1 -> VPU mul)
    t_emb = t * g32("w_t") + g32("b_t")      # (B, EMB)
    x = jnp.dot(x0, g32("w_in"), preferred_element_type=f32) + g32("b_in")
    x = x + t_emb                            # (B, EMB)

    for blk in range(NUM_BLOCKS):
        # Attention with seq_len == 1: RoPE is identity and softmax over the
        # single key position is exactly 1.0 -> attn output == V.  The q/k/
        # score/exp path is mathematically dead and omitted (exact vs. ref).
        v = jnp.dot(x, g32(f"wv{blk}"), preferred_element_type=f32) + g32(f"bv{blk}")
        attn = jnp.dot(v, g32(f"wo{blk}"), preferred_element_type=f32) + g32(f"bo{blk}")

        h = _layernorm(x + attn, g32(f"g1{blk}"), g32(f"be1{blk}"))
        m = jnp.dot(h, g64(f"w1{blk}"), preferred_element_type=f32) + g64(f"b1{blk}")
        m = jnp.maximum(m, 0.0)
        m = jnp.dot(m, g32(f"w2{blk}"), preferred_element_type=f32) + g32(f"b2{blk}")
        x = _layernorm(x + m, g32(f"g2{blk}"), g32(f"be2{blk}"))

    out_ref[...] = (jnp.dot(x, g16("w_out"), preferred_element_type=f32)
                    + g16("b_out"))


def pack_params(params):
    """Pack all (transposed) weights/biases into 3 lane-dense f32 buffers."""
    p32 = np.zeros((P32_ROWS, EMB), np.float32)
    p64 = np.zeros((P64_ROWS, HID), np.float32)
    p16 = np.zeros((P16_ROWS, LATENT), np.float32)

    def put(buf, lay, name, val):
        off, rows = lay[name]
        buf[off:off + rows, :] = np.asarray(val, np.float32).reshape(rows, -1)

    put(p32, P32_LAYOUT, "w_in", params["w_in"])
    put(p32, P32_LAYOUT, "w_t", params["w_t"])
    put(p32, P32_LAYOUT, "b_in", params["b_in"])
    put(p32, P32_LAYOUT, "b_t", params["b_t"])
    for blk in range(NUM_BLOCKS):
        put(p32, P32_LAYOUT, f"wv{blk}", params["wv"][blk])
        put(p32, P32_LAYOUT, f"bv{blk}", params["bv"][blk])
        put(p32, P32_LAYOUT, f"wo{blk}", params["wo"][blk])
        put(p32, P32_LAYOUT, f"bo{blk}", params["bo"][blk])
        put(p32, P32_LAYOUT, f"w2{blk}", params["w2"][blk])
        put(p32, P32_LAYOUT, f"b2{blk}", params["b2"][blk])
        put(p32, P32_LAYOUT, f"g1{blk}", params["g1"][blk])
        put(p32, P32_LAYOUT, f"be1{blk}", params["be1"][blk])
        put(p32, P32_LAYOUT, f"g2{blk}", params["g2"][blk])
        put(p32, P32_LAYOUT, f"be2{blk}", params["be2"][blk])
        put(p64, P64_LAYOUT, f"w1{blk}", params["w1"][blk])
        put(p64, P64_LAYOUT, f"b1{blk}", params["b1"][blk])
    put(p16, P16_LAYOUT, "w_out", params["w_out"])
    put(p16, P16_LAYOUT, "b_out", params["b_out"])
    return jnp.asarray(p32), jnp.asarray(p64), jnp.asarray(p16)


def diffusion_transformer(latents, t, params):
    """latents: (B, LATENT) f32, t: (B, 1) f32 -> (B, LATENT) f32."""
    p32, p64, p16 = pack_params(params)
    return pl.pallas_call(
        dit_kernel,
        out_shape=jax.ShapeDtypeStruct((B, LATENT), jnp.float32),
        grid_spec=pltpu.PrefetchScalarGridSpec(
            num_scalar_prefetch=0,
            grid=(1,),                       # single step: problem fits one tile
            in_specs=[
                pl.BlockSpec((B, LATENT), lambda i: (0, 0)),
                pl.BlockSpec((B, 1), lambda i: (0, 0)),
                pl.BlockSpec((P32_ROWS, EMB), lambda i: (0, 0)),
                pl.BlockSpec((P64_ROWS, HID), lambda i: (0, 0)),
                pl.BlockSpec((P16_ROWS, LATENT), lambda i: (0, 0)),
            ],
            out_specs=pl.BlockSpec((B, LATENT), lambda i: (0, 0)),
        ),
        compiler_params=pltpu.CompilerParams(
            dimension_semantics=("arbitrary",)),
    )(latents, t, p32, p64, p16)


def reference(latents, t, params):
    """Pure-JAX reference with the module's (s == 1) semantics, incl. softmax."""
    x = latents @ params["w_in"] + params["b_in"] + (t * params["w_t"] + params["b_t"])

    def ln(z, g, b):
        mu = jnp.mean(z, -1, keepdims=True)
        var = jnp.mean((z - mu) ** 2, -1, keepdims=True)
        return (z - mu) / jnp.sqrt(var + EPS) * g + b

    qdim = EMB // NUM_HEADS
    for blk in range(NUM_BLOCKS):
        q = x @ params["wq"][blk] + params["bq"][blk]
        k = x @ params["wk"][blk] + params["bk"][blk]
        v = x @ params["wv"][blk] + params["bv"][blk]
        qh = q.reshape(-1, NUM_HEADS, qdim)
        kh = k.reshape(-1, NUM_GROUPS, EMB // NUM_GROUPS)
        vh = v.reshape(-1, NUM_GROUPS, EMB // NUM_GROUPS)
        e = (qh * kh).sum(-1) / math.sqrt(qdim)                 # (B, H)
        w = jax.nn.softmax(e[..., None], axis=-1)[..., 0]       # ones (single key)
        attn = (w[..., None] * vh).reshape(-1, EMB)
        attn = attn @ params["wo"][blk] + params["bo"][blk]
        h = ln(x + attn, params["g1"][blk], params["be1"][blk])
        m = jnp.maximum(h @ params["w1"][blk] + params["b1"][blk], 0.0)
        m = m @ params["w2"][blk] + params["b2"][blk]
        x = ln(x + m, params["g2"][blk], params["be2"][blk])
    return x @ params["w_out"] + params["b_out"]


if __name__ == "__main__":
    key = jax.random.PRNGKey(0)
    keys = iter(jax.random.split(key, 40))

    def nrm(shape, scale=0.1):
        return scale * jax.random.normal(next(keys), shape, dtype=jnp.float32)

    latents = nrm((B, LATENT), scale=1.0)
    t = jnp.linspace(0.0, 1.0, B, dtype=jnp.float32)[:, None]   # (B, 1)

    params = {
        "w_in": nrm((LATENT, EMB)), "b_in": nrm((1, EMB)),
        "w_t": nrm((1, EMB)), "b_t": nrm((1, EMB)),
        "wq": nrm((NUM_BLOCKS, EMB, EMB)), "bq": nrm((NUM_BLOCKS, EMB)),
        "wk": nrm((NUM_BLOCKS, EMB, EMB)), "bk": nrm((NUM_BLOCKS, EMB)),
        "wv": nrm((NUM_BLOCKS, EMB, EMB)), "bv": nrm((NUM_BLOCKS, EMB)),
        "wo": nrm((NUM_BLOCKS, EMB, EMB)), "bo": nrm((NUM_BLOCKS, EMB)),
        "w1": nrm((NUM_BLOCKS, EMB, HID)), "b1": nrm((NUM_BLOCKS, HID)),
        "w2": nrm((NUM_BLOCKS, HID, EMB)), "b2": nrm((NUM_BLOCKS, EMB)),
        "g1": jnp.ones((NUM_BLOCKS, EMB), jnp.float32),
        "be1": jnp.zeros((NUM_BLOCKS, EMB), jnp.float32),
        "g2": jnp.ones((NUM_BLOCKS, EMB), jnp.float32),
        "be2": jnp.zeros((NUM_BLOCKS, EMB), jnp.float32),
        "w_out": nrm((EMB, LATENT)), "b_out": nrm((1, LATENT)),
    }

    out = diffusion_transformer(latents, t, params)
    out = jax.block_until_ready(out)

    ref = jax.block_until_ready(reference(latents, t, params))
    np.testing.assert_allclose(np.asarray(out), np.asarray(ref), atol=1e-4, rtol=1e-4)

    print("KERNEL_OK")
</pallas_src>

<mosaic_0001>
module attributes {stable_mosaic.version = 11 : i64} {
  func.func @dit_kernel(%arg0: i32, %arg1: memref<16x16xf32, #tpu.memory_space<vmem>>, %arg2: memref<16x1xf32, #tpu.memory_space<vmem>>, %arg3: memref<408x32xf32, #tpu.memory_space<vmem>>, %arg4: memref<80x64xf32, #tpu.memory_space<vmem>>, %arg5: memref<40x16xf32, #tpu.memory_space<vmem>>, %arg6: memref<16x16xf32, #tpu.memory_space<vmem>>) attributes {dimension_semantics = [#tpu.dimension_semantics<arbitrary>], iteration_bounds = array<i64: 1>, scalar_prefetch = 0 : i64, scratch_operands = 0 : i64, tpu.core_type = #tpu.core_type<tc>, window_params = [{pipeline_mode = #tpu.pipeline_mode<synchronous>, transform_indices = @transform_0, window_bounds = array<i64: 16, 16>}, {pipeline_mode = #tpu.pipeline_mode<synchronous>, transform_indices = @transform_1, window_bounds = array<i64: 16, 1>}, {pipeline_mode = #tpu.pipeline_mode<synchronous>, transform_indices = @transform_2, window_bounds = array<i64: 408, 32>}, {pipeline_mode = #tpu.pipeline_mode<synchronous>, transform_indices = @transform_3, window_bounds = array<i64: 80, 64>}, {pipeline_mode = #tpu.pipeline_mode<synchronous>, transform_indices = @transform_4, window_bounds = array<i64: 40, 16>}, {pipeline_mode = #tpu.pipeline_mode<synchronous>, transform_indices = @transform_5, window_bounds = array<i64: 16, 16>}]} {
    %c0 = arith.constant 0 : index
    %c0_0 = arith.constant 0 : index
    %0 = vector.load %arg1[%c0, %c0_0] : memref<16x16xf32, #tpu.memory_space<vmem>>, vector<16x16xf32>
    %c0_1 = arith.constant 0 : index
    %c0_2 = arith.constant 0 : index
    %1 = vector.load %arg2[%c0_1, %c0_2] : memref<16x1xf32, #tpu.memory_space<vmem>>, vector<16x1xf32>
    %c16 = arith.constant 16 : index
    %c0_3 = arith.constant 0 : index
    %2 = vector.load %arg3[%c16, %c0_3] : memref<408x32xf32, #tpu.memory_space<vmem>>, vector<1x32xf32>
    %3 = vector.broadcast %1 : vector<16x1xf32> to vector<16x32xf32>
    %4 = vector.broadcast %2 : vector<1x32xf32> to vector<16x32xf32>
    %5 = arith.mulf %3, %4 : vector<16x32xf32>
    %c32 = arith.constant 32 : index
    %c0_4 = arith.constant 0 : index
    %6 = vector.load %arg3[%c32, %c0_4] : memref<408x32xf32, #tpu.memory_space<vmem>>, vector<1x32xf32>
    %7 = vector.broadcast %6 : vector<1x32xf32> to vector<16x32xf32>
    %8 = arith.addf %5, %7 : vector<16x32xf32>
    %c0_5 = arith.constant 0 : index
    %c0_6 = arith.constant 0 : index
    %9 = vector.load %arg3[%c0_5, %c0_6] : memref<408x32xf32, #tpu.memory_space<vmem>>, vector<16x32xf32>
    %cst = arith.constant dense<0.000000e+00> : vector<16x32xf32>
    %10 = tpu.matmul %0, %9, %cst {dimension_numbers = #tpu.dot_dimension_numbers<[1], [0], [0], [1], [0, 0, 1, 1], [], []>} : vector<16x16xf32>, vector<16x32xf32>, vector<16x32xf32> -> vector<16x32xf32>
    %c24 = arith.constant 24 : index
    %c0_7 = arith.constant 0 : index
    %11 = vector.load %arg3[%c24, %c0_7] : memref<408x32xf32, #tpu.memory_space<vmem>>, vector<1x32xf32>
    %12 = vector.broadcast %11 : vector<1x32xf32> to vector<16x32xf32>
    %13 = arith.addf %10, %12 : vector<16x32xf32>
    %14 = arith.addf %13, %8 : vector<16x32xf32>
    %c40 = arith.constant 40 : index
    %c0_8 = arith.constant 0 : index
    %15 = vector.load %arg3[%c40, %c0_8] : memref<408x32xf32, #tpu.memory_space<vmem>>, vector<32x32xf32>
    %cst_9 = arith.constant dense<0.000000e+00> : vector<16x32xf32>
    %16 = tpu.matmul %14, %15, %cst_9 {dimension_numbers = #tpu.dot_dimension_numbers<[1], [0], [0], [1], [0, 0, 1, 1], [], []>} : vector<16x32xf32>, vector<32x32xf32>, vector<16x32xf32> -> vector<16x32xf32>
    %c72 = arith.constant 72 : index
    %c0_10 = arith.constant 0 : index
    %17 = vector.load %arg3[%c72, %c0_10] : memref<408x32xf32, #tpu.memory_space<vmem>>, vector<1x32xf32>
    %18 = vector.broadcast %17 : vector<1x32xf32> to vector<16x32xf32>
    %19 = arith.addf %16, %18 : vector<16x32xf32>
    %c80 = arith.constant 80 : index
    %c0_11 = arith.constant 0 : index
    %20 = vector.load %arg3[%c80, %c0_11] : memref<408x32xf32, #tpu.memory_space<vmem>>, vector<32x32xf32>
    %cst_12 = arith.constant dense<0.000000e+00> : vector<16x32xf32>
    %21 = tpu.matmul %19, %20, %cst_12 {dimension_numbers = #tpu.dot_dimension_numbers<[1], [0], [0], [1], [0, 0, 1, 1], [], []>} : vector<16x32xf32>, vector<32x32xf32>, vector<16x32xf32> -> vector<16x32xf32>
    %c112 = arith.constant 112 : index
    %c0_13 = arith.constant 0 : index
    %22 = vector.load %arg3[%c112, %c0_13] : memref<408x32xf32, #tpu.memory_space<vmem>>, vector<1x32xf32>
    %23 = vector.broadcast %22 : vector<1x32xf32> to vector<16x32xf32>
    %24 = arith.addf %21, %23 : vector<16x32xf32>
    %25 = arith.addf %14, %24 : vector<16x32xf32>
    %c192 = arith.constant 192 : index
    %c0_14 = arith.constant 0 : index
    %26 = vector.load %arg3[%c192, %c0_14] : memref<408x32xf32, #tpu.memory_space<vmem>>, vector<1x32xf32>
    %c200 = arith.constant 200 : index
    %c0_15 = arith.constant 0 : index
    %27 = vector.load %arg3[%c200, %c0_15] : memref<408x32xf32, #tpu.memory_space<vmem>>, vector<1x32xf32>
    %cst_16 = arith.constant dense<0.000000e+00> : vector<16xf32>
    %28 = vector.multi_reduction <add>, %25, %cst_16 [1] : vector<16x32xf32> to vector<16xf32>
    %29 = vector.shape_cast %28 : vector<16xf32> to vector<16x1xf32>
    %cst_17 = arith.constant 3.200000e+01 : f32
    %30 = vector.broadcast %cst_17 : f32 to vector<16x1xf32>
    %31 = arith.divf %29, %30 : vector<16x1xf32>
    %32 = vector.broadcast %31 : vector<16x1xf32> to vector<16x32xf32>
    %33 = arith.subf %25, %32 : vector<16x32xf32>
    %34 = arith.mulf %33, %33 : vector<16x32xf32>
    %cst_18 = arith.constant dense<0.000000e+00> : vector<16xf32>
    %35 = vector.multi_reduction <add>, %34, %cst_18 [1] : vector<16x32xf32> to vector<16xf32>
    %36 = vector.shape_cast %35 : vector<16xf32> to vector<16x1xf32>
    %cst_19 = arith.constant 3.200000e+01 : f32
    %37 = vector.broadcast %cst_19 : f32 to vector<16x1xf32>
    %38 = arith.divf %36, %37 : vector<16x1xf32>
    %39 = vector.broadcast %31 : vector<16x1xf32> to vector<16x32xf32>
    %40 = arith.subf %25, %39 : vector<16x32xf32>
    %cst_20 = arith.constant 9.99999974E-6 : f32
    %41 = vector.broadcast %cst_20 : f32 to vector<16x1xf32>
    %42 = arith.addf %38, %41 : vector<16x1xf32>
    %43 = math.rsqrt %42 : vector<16x1xf32>
    %44 = vector.broadcast %43 : vector<16x1xf32> to vector<16x32xf32>
    %45 = arith.mulf %40, %44 : vector<16x32xf32>
    %46 = vector.broadcast %26 : vector<1x32xf32> to vector<16x32xf32>
    %47 = arith.mulf %45, %46 : vector<16x32xf32>
    %48 = vector.broadcast %27 : vector<1x32xf32> to vector<16x32xf32>
    %49 = arith.addf %47, %48 : vector<16x32xf32>
    %c0_21 = arith.constant 0 : index
    %c0_22 = arith.constant 0 : index
    %50 = vector.load %arg4[%c0_21, %c0_22] : memref<80x64xf32, #tpu.memory_space<vmem>>, vector<32x64xf32>
    %cst_23 = arith.constant dense<0.000000e+00> : vector<16x64xf32>
    %51 = tpu.matmul %49, %50, %cst_23 {dimension_numbers = #tpu.dot_dimension_numbers<[1], [0], [0], [1], [0, 0, 1, 1], [], []>} : vector<16x32xf32>, vector<32x64xf32>, vector<16x64xf32> -> vector<16x64xf32>
    %c32_24 = arith.constant 32 : index
    %c0_25 = arith.constant 0 : index
    %52 = vector.load %arg4[%c32_24, %c0_25] : memref<80x64xf32, #tpu.memory_space<vmem>>, vector<1x64xf32>
    %53 = vector.broadcast %52 : vector<1x64xf32> to vector<16x64xf32>
    %54 = arith.addf %51, %53 : vector<16x64xf32>
    %cst_26 = arith.constant 0.000000e+00 : f32
    %55 = vector.broadcast %cst_26 : f32 to vector<16x64xf32>
    %56 = arith.maximumf %54, %55 : vector<16x64xf32>
    %c120 = arith.constant 120 : index
    %c0_27 = arith.constant 0 : index
    %57 = vector.load %arg3[%c120, %c0_27] : memref<408x32xf32, #tpu.memory_space<vmem>>, vector<64x32xf32>
    %cst_28 = arith.constant dense<0.000000e+00> : vector<16x32xf32>
    %58 = tpu.matmul %56, %57, %cst_28 {dimension_numbers = #tpu.dot_dimension_numbers<[1], [0], [0], [1], [0, 0, 1, 1], [], []>} : vector<16x64xf32>, vector<64x32xf32>, vector<16x32xf32> -> vector<16x32xf32>
    %c184 = arith.constant 184 : index
    %c0_29 = arith.constant 0 : index
    %59 = vector.load %arg3[%c184, %c0_29] : memref<408x32xf32, #tpu.memory_space<vmem>>, vector<1x32xf32>
    %60 = vector.broadcast %59 : vector<1x32xf32> to vector<16x32xf32>
    %61 = arith.addf %58, %60 : vector<16x32xf32>
    %62 = arith.addf %14, %61 : vector<16x32xf32>
    %c208 = arith.constant 208 : index
    %c0_30 = arith.constant 0 : index
    %63 = vector.load %arg3[%c208, %c0_30] : memref<408x32xf32, #tpu.memory_space<vmem>>, vector<1x32xf32>
    %c216 = arith.constant 216 : index
    %c0_31 = arith.constant 0 : index
    %64 = vector.load %arg3[%c216, %c0_31] : memref<408x32xf32, #tpu.memory_space<vmem>>, vector<1x32xf32>
    %cst_32 = arith.constant dense<0.000000e+00> : vector<16xf32>
    %65 = vector.multi_reduction <add>, %62, %cst_32 [1] : vector<16x32xf32> to vector<16xf32>
    %66 = vector.shape_cast %65 : vector<16xf32> to vector<16x1xf32>
    %cst_33 = arith.constant 3.200000e+01 : f32
    %67 = vector.broadcast %cst_33 : f32 to vector<16x1xf32>
    %68 = arith.divf %66, %67 : vector<16x1xf32>
    %69 = vector.broadcast %68 : vector<16x1xf32> to vector<16x32xf32>
    %70 = arith.subf %62, %69 : vector<16x32xf32>
    %71 = arith.mulf %70, %70 : vector<16x32xf32>
    %cst_34 = arith.constant dense<0.000000e+00> : vector<16xf32>
    %72 = vector.multi_reduction <add>, %71, %cst_34 [1] : vector<16x32xf32> to vector<16xf32>
    %73 = vector.shape_cast %72 : vector<16xf32> to vector<16x1xf32>
    %cst_35 = arith.constant 3.200000e+01 : f32
    %74 = vector.broadcast %cst_35 : f32 to vector<16x1xf32>
    %75 = arith.divf %73, %74 : vector<16x1xf32>
    %76 = vector.broadcast %68 : vector<16x1xf32> to vector<16x32xf32>
    %77 = arith.subf %62, %76 : vector<16x32xf32>
    %cst_36 = arith.constant 9.99999974E-6 : f32
    %78 = vector.broadcast %cst_36 : f32 to vector<16x1xf32>
    %79 = arith.addf %75, %78 : vector<16x1xf32>
    %80 = math.rsqrt %79 : vector<16x1xf32>
    %81 = vector.broadcast %80 : vector<16x1xf32> to vector<16x32xf32>
    %82 = arith.mulf %77, %81 : vector<16x32xf32>
    %83 = vector.broadcast %63 : vector<1x32xf32> to vector<16x32xf32>
    %84 = arith.mulf %82, %83 : vector<16x32xf32>
    %85 = vector.broadcast %64 : vector<1x32xf32> to vector<16x32xf32>
    %86 = arith.addf %84, %85 : vector<16x32xf32>
    %c224 = arith.constant 224 : index
    %c0_37 = arith.constant 0 : index
    %87 = vector.load %arg3[%c224, %c0_37] : memref<408x32xf32, #tpu.memory_space<vmem>>, vector<32x32xf32>
    %cst_38 = arith.constant dense<0.000000e+00> : vector<16x32xf32>
    %88 = tpu.matmul %86, %87, %cst_38 {dimension_numbers = #tpu.dot_dimension_numbers<[1], [0], [0], [1], [0, 0, 1, 1], [], []>} : vector<16x32xf32>, vector<32x32xf32>, vector<16x32xf32> -> vector<16x32xf32>
    %c256 = arith.constant 256 : index
    %c0_39 = arith.constant 0 : index
    %89 = vector.load %arg3[%c256, %c0_39] : memref<408x32xf32, #tpu.memory_space<vmem>>, vector<1x32xf32>
    %90 = vector.broadcast %89 : vector<1x32xf32> to vector<16x32xf32>
    %91 = arith.addf %88, %90 : vector<16x32xf32>
    %c264 = arith.constant 264 : index
    %c0_40 = arith.constant 0 : index
    %92 = vector.load %arg3[%c264, %c0_40] : memref<408x32xf32, #tpu.memory_space<vmem>>, vector<32x32xf32>
    %cst_41 = arith.constant dense<0.000000e+00> : vector<16x32xf32>
    %93 = tpu.matmul %91, %92, %cst_41 {dimension_numbers = #tpu.dot_dimension_numbers<[1], [0], [0], [1], [0, 0, 1, 1], [], []>} : vector<16x32xf32>, vector<32x32xf32>, vector<16x32xf32> -> vector<16x32xf32>
    %c296 = arith.constant 296 : index
    %c0_42 = arith.constant 0 : index
    %94 = vector.load %arg3[%c296, %c0_42] : memref<408x32xf32, #tpu.memory_space<vmem>>, vector<1x32xf32>
    %95 = vector.broadcast %94 : vector<1x32xf32> to vector<16x32xf32>
    %96 = arith.addf %93, %95 : vector<16x32xf32>
    %97 = arith.addf %86, %96 : vector<16x32xf32>
    %c376 = arith.constant 376 : index
    %c0_43 = arith.constant 0 : index
    %98 = vector.load %arg3[%c376, %c0_43] : memref<408x32xf32, #tpu.memory_space<vmem>>, vector<1x32xf32>
    %c384 = arith.constant 384 : index
    %c0_44 = arith.constant 0 : index
    %99 = vector.load %arg3[%c384, %c0_44] : memref<408x32xf32, #tpu.memory_space<vmem>>, vector<1x32xf32>
    %cst_45 = arith.constant dense<0.000000e+00> : vector<16xf32>
    %100 = vector.multi_reduction <add>, %97, %cst_45 [1] : vector<16x32xf32> to vector<16xf32>
    %101 = vector.shape_cast %100 : vector<16xf32> to vector<16x1xf32>
    %cst_46 = arith.constant 3.200000e+01 : f32
    %102 = vector.broadcast %cst_46 : f32 to vector<16x1xf32>
    %103 = arith.divf %101, %102 : vector<16x1xf32>
    %104 = vector.broadcast %103 : vector<16x1xf32> to vector<16x32xf32>
    %105 = arith.subf %97, %104 : vector<16x32xf32>
    %106 = arith.mulf %105, %105 : vector<16x32xf32>
    %cst_47 = arith.constant dense<0.000000e+00> : vector<16xf32>
    %107 = vector.multi_reduction <add>, %106, %cst_47 [1] : vector<16x32xf32> to vector<16xf32>
    %108 = vector.shape_cast %107 : vector<16xf32> to vector<16x1xf32>
    %cst_48 = arith.constant 3.200000e+01 : f32
    %109 = vector.broadcast %cst_48 : f32 to vector<16x1xf32>
    %110 = arith.divf %108, %109 : vector<16x1xf32>
    %111 = vector.broadcast %103 : vector<16x1xf32> to vector<16x32xf32>
    %112 = arith.subf %97, %111 : vector<16x32xf32>
    %cst_49 = arith.constant 9.99999974E-6 : f32
    %113 = vector.broadcast %cst_49 : f32 to vector<16x1xf32>
    %114 = arith.addf %110, %113 : vector<16x1xf32>
    %115 = math.rsqrt %114 : vector<16x1xf32>
    %116 = vector.broadcast %115 : vector<16x1xf32> to vector<16x32xf32>
    %117 = arith.mulf %112, %116 : vector<16x32xf32>
    %118 = vector.broadcast %98 : vector<1x32xf32> to vector<16x32xf32>
    %119 = arith.mulf %117, %118 : vector<16x32xf32>
    %120 = vector.broadcast %99 : vector<1x32xf32> to vector<16x32xf32>
    %121 = arith.addf %119, %120 : vector<16x32xf32>
    %c40_50 = arith.constant 40 : index
    %c0_51 = arith.constant 0 : index
    %122 = vector.load %arg4[%c40_50, %c0_51] : memref<80x64xf32, #tpu.memory_space<vmem>>, vector<32x64xf32>
    %cst_52 = arith.constant dense<0.000000e+00> : vector<16x64xf32>
    %123 = tpu.matmul %121, %122, %cst_52 {dimension_numbers = #tpu.dot_dimension_numbers<[1], [0], [0], [1], [0, 0, 1, 1], [], []>} : vector<16x32xf32>, vector<32x64xf32>, vector<16x64xf32> -> vector<16x64xf32>
    %c72_53 = arith.constant 72 : index
    %c0_54 = arith.constant 0 : index
    %124 = vector.load %arg4[%c72_53, %c0_54] : memref<80x64xf32, #tpu.memory_space<vmem>>, vector<1x64xf32>
    %125 = vector.broadcast %124 : vector<1x64xf32> to vector<16x64xf32>
    %126 = arith.addf %123, %125 : vector<16x64xf32>
    %cst_55 = arith.constant 0.000000e+00 : f32
    %127 = vector.broadcast %cst_55 : f32 to vector<16x64xf32>
    %128 = arith.maximumf %126, %127 : vector<16x64xf32>
    %c304 = arith.constant 304 : index
    %c0_56 = arith.constant 0 : index
    %129 = vector.load %arg3[%c304, %c0_56] : memref<408x32xf32, #tpu.memory_space<vmem>>, vector<64x32xf32>
    %cst_57 = arith.constant dense<0.000000e+00> : vector<16x32xf32>
    %130 = tpu.matmul %128, %129, %cst_57 {dimension_numbers = #tpu.dot_dimension_numbers<[1], [0], [0], [1], [0, 0, 1, 1], [], []>} : vector<16x64xf32>, vector<64x32xf32>, vector<16x32xf32> -> vector<16x32xf32>
    %c368 = arith.constant 368 : index
    %c0_58 = arith.constant 0 : index
    %131 = vector.load %arg3[%c368, %c0_58] : memref<408x32xf32, #tpu.memory_space<vmem>>, vector<1x32xf32>
    %132 = vector.broadcast %131 : vector<1x32xf32> to vector<16x32xf32>
    %133 = arith.addf %130, %132 : vector<16x32xf32>
    %134 = arith.addf %86, %133 : vector<16x32xf32>
    %c392 = arith.constant 392 : index
    %c0_59 = arith.constant 0 : index
    %135 = vector.load %arg3[%c392, %c0_59] : memref<408x32xf32, #tpu.memory_space<vmem>>, vector<1x32xf32>
    %c400 = arith.constant 400 : index
    %c0_60 = arith.constant 0 : index
    %136 = vector.load %arg3[%c400, %c0_60] : memref<408x32xf32, #tpu.memory_space<vmem>>, vector<1x32xf32>
    %cst_61 = arith.constant dense<0.000000e+00> : vector<16xf32>
    %137 = vector.multi_reduction <add>, %134, %cst_61 [1] : vector<16x32xf32> to vector<16xf32>
    %138 = vector.shape_cast %137 : vector<16xf32> to vector<16x1xf32>
    %cst_62 = arith.constant 3.200000e+01 : f32
    %139 = vector.broadcast %cst_62 : f32 to vector<16x1xf32>
    %140 = arith.divf %138, %139 : vector<16x1xf32>
    %141 = vector.broadcast %140 : vector<16x1xf32> to vector<16x32xf32>
    %142 = arith.subf %134, %141 : vector<16x32xf32>
    %143 = arith.mulf %142, %142 : vector<16x32xf32>
    %cst_63 = arith.constant dense<0.000000e+00> : vector<16xf32>
    %144 = vector.multi_reduction <add>, %143, %cst_63 [1] : vector<16x32xf32> to vector<16xf32>
    %145 = vector.shape_cast %144 : vector<16xf32> to vector<16x1xf32>
    %cst_64 = arith.constant 3.200000e+01 : f32
    %146 = vector.broadcast %cst_64 : f32 to vector<16x1xf32>
    %147 = arith.divf %145, %146 : vector<16x1xf32>
    %148 = vector.broadcast %140 : vector<16x1xf32> to vector<16x32xf32>
    %149 = arith.subf %134, %148 : vector<16x32xf32>
    %cst_65 = arith.constant 9.99999974E-6 : f32
    %150 = vector.broadcast %cst_65 : f32 to vector<16x1xf32>
    %151 = arith.addf %147, %150 : vector<16x1xf32>
    %152 = math.rsqrt %151 : vector<16x1xf32>
    %153 = vector.broadcast %152 : vector<16x1xf32> to vector<16x32xf32>
    %154 = arith.mulf %149, %153 : vector<16x32xf32>
    %155 = vector.broadcast %135 : vector<1x32xf32> to vector<16x32xf32>
    %156 = arith.mulf %154, %155 : vector<16x32xf32>
    %157 = vector.broadcast %136 : vector<1x32xf32> to vector<16x32xf32>
    %158 = arith.addf %156, %157 : vector<16x32xf32>
    %c0_66 = arith.constant 0 : index
    %c0_67 = arith.constant 0 : index
    %159 = vector.load %arg5[%c0_66, %c0_67] : memref<40x16xf32, #tpu.memory_space<vmem>>, vector<32x16xf32>
    %cst_68 = arith.constant dense<0.000000e+00> : vector<16x16xf32>
    %160 = tpu.matmul %158, %159, %cst_68 {dimension_numbers = #tpu.dot_dimension_numbers<[1], [0], [0], [1], [0, 0, 1, 1], [], []>} : vector<16x32xf32>, vector<32x16xf32>, vector<16x16xf32> -> vector<16x16xf32>
    %c32_69 = arith.constant 32 : index
    %c0_70 = arith.constant 0 : index
    %161 = vector.load %arg5[%c32_69, %c0_70] : memref<40x16xf32, #tpu.memory_space<vmem>>, vector<1x16xf32>
    %162 = vector.broadcast %161 : vector<1x16xf32> to vector<16x16xf32>
    %163 = arith.addf %160, %162 : vector<16x16xf32>
    %c0_71 = arith.constant 0 : index
    %c0_72 = arith.constant 0 : index
    %164 = vector.load %arg6[%c0_71, %c0_72] : memref<16x16xf32, #tpu.memory_space<vmem>>, vector<16x16xf32>
    tpu.vector_store %arg6[%c0_71, %c0_72], %163 {strides = array<i32>} : memref<16x16xf32, #tpu.memory_space<vmem>>, vector<16x16xf32>,
    return
  }
  func.func @transform_0(%arg0: i32) -> (i32, i32) {
    %c0_i32 = arith.constant 0 : i32
    %c0_i32_0 = arith.constant 0 : i32
    %c0_i32_1 = arith.constant 0 : i32
    return %c0_i32, %c0_i32_0 : i32, i32
  }
  func.func @transform_1(%arg0: i32) -> (i32, i32) {
    %c0_i32 = arith.constant 0 : i32
    %c0_i32_0 = arith.constant 0 : i32
    %c0_i32_1 = arith.constant 0 : i32
    return %c0_i32, %c0_i32_0 : i32, i32
  }
  func.func @transform_2(%arg0: i32) -> (i32, i32) {
    %c0_i32 = arith.constant 0 : i32
    %c0_i32_0 = arith.constant 0 : i32
    %c0_i32_1 = arith.constant 0 : i32
    return %c0_i32, %c0_i32_0 : i32, i32
  }
  func.func @transform_3(%arg0: i32) -> (i32, i32) {
    %c0_i32 = arith.constant 0 : i32
    %c0_i32_0 = arith.constant 0 : i32
    %c0_i32_1 = arith.constant 0 : i32
    return %c0_i32, %c0_i32_0 : i32, i32
  }
  func.func @transform_4(%arg0: i32) -> (i32, i32) {
    %c0_i32 = arith.constant 0 : i32
    %c0_i32_0 = arith.constant 0 : i32
    %c0_i32_1 = arith.constant 0 : i32
    return %c0_i32, %c0_i32_0 : i32, i32
  }
  func.func @transform_5(%arg0: i32) -> (i32, i32) {
    %c0_i32 = arith.constant 0 : i32
    %c0_i32_0 = arith.constant 0 : i32
    %c0_i32_1 = arith.constant 0 : i32
    return %c0_i32, %c0_i32_0 : i32, i32
  }
}

</mosaic_0001>

<llo_original>
// kernel: tpu_custom_call.1
$region0: #{tpu_custom_call.1}
  #allocation0 [shape = 'u32[]', space=smem, size = 0x4, offset = 0x4, fixed_abs, tag = 'smem constant byte address 0x4 - core index']
  #allocation1 [shape = 'u32[144,128]{1,0:T(1,128)}', space=vmem, size = 0x12000, scoped, tag = 'internal scratch']
  %s0 = inlined_call_operand.vmem [shape: f32[16,16], index: 0, kind: input, shape index: {}]
  %s1 = inlined_call_operand.vmem [shape: f32[16,1], index: 1, kind: input, shape index: {}]
  %s2 = inlined_call_operand.vmem [shape: f32[408,32], index: 2, kind: input, shape index: {}]
  %s3 = inlined_call_operand.vmem [shape: f32[80,64], index: 3, kind: input, shape index: {}]
  %s4 = inlined_call_operand.vmem [shape: f32[40,16], index: 4, kind: input, shape index: {}]
  %s5 = inlined_call_operand.hbm [shape: f32[16,16], index: 5, kind: output, shape index: {}]
  %s6 = sld [smem:[#allocation0]]
  $region30: #{tpu_custom_call.1} parent=0
    _
  %s8 = ssub.s32 1, %s6
  %s9 = scalar_select 0, %s8, %s6
  $region1: #{tpu_custom_call.1} parent=0
    #allocation2 [shape = 'u8[8192]{0}', space=vmem, size = 0x2000, scoped, tag = 'output window, operand 0, single buffered']
    #allocation3 [shape = 's32[1]{0}', space=sflag, size = 0x4, scoped, tag = 'scoped memory for tpu_custom_call.1']
    %10 = vsyncpa [#allocation3], 0
    // Predicated region
    $region2: #{tpu_custom_call.1} parent=1 // pred_check
      _
    $region3: #{tpu_custom_call.1} parent=1 // pred_check_branch
      %12 = sbr.rel (0) target = $region5
    $region4: #{tpu_custom_call.1} parent=1 // pred_region
      _
    $region5: #{tpu_custom_call.1} parent=1 // pred_fallthru
      _
    // Predicated region
    $region6: #{tpu_custom_call.1} parent=1 // pred_check
      _
    $region7: #{tpu_custom_call.1} parent=1 // pred_check_branch
      %14 = sbr.rel (0) target = $region9
    $region8: #{tpu_custom_call.1} parent=1 // pred_region
      _
    $region9: #{tpu_custom_call.1} parent=1 // pred_fallthru
      _
    // Predicated region
    $region10: #{tpu_custom_call.1} parent=1 // pred_check
      _
    $region11: #{tpu_custom_call.1} parent=1 // pred_check_branch
      %16 = sbr.rel (0) target = $region13
    $region12: #{tpu_custom_call.1} parent=1 // pred_region
      _
    $region13: #{tpu_custom_call.1} parent=1 // pred_fallthru
      _
    // Predicated region
    $region14: #{tpu_custom_call.1} parent=1 // pred_check
      _
    $region15: #{tpu_custom_call.1} parent=1 // pred_check_branch
      %18 = sbr.rel (0) target = $region17
    $region16: #{tpu_custom_call.1} parent=1 // pred_region
      _
    $region17: #{tpu_custom_call.1} parent=1 // pred_fallthru
      _
    // Predicated region
    $region18: #{tpu_custom_call.1} parent=1 // pred_check
      _
    $region19: #{tpu_custom_call.1} parent=1 // pred_check_branch
      %20 = sbr.rel (0) target = $region21
    $region20: #{tpu_custom_call.1} parent=1 // pred_region
      _
    $region21: #{tpu_custom_call.1} parent=1 // pred_fallthru
      _
    %v21 = vld [vmem:[%s0] sm:$0xff]
    %v22 = vld [vmem:[%s0 + $0x8] sm:$0xff]
    %v23 = vld [vmem:[%s1] sm:$0xff]
    %v24 = vld [vmem:[%s1 + $0x8] sm:$0xff]
    %v25 = vld [vmem:[%s2 + $0x10] sm:$0x1]
    %27 = vset.pattern.permute.xlu0 0
    %28 = vperm.xlu0 %27, %v23
    %v29 = vpop.permute.xlu0 %28
    %32 = vset.pattern.permute.xlu0 0
    %33 = vperm.xlu0 %32, %v24
    %v34 = vpop.permute.xlu0 %33
    %v36 = vlaneseq
    %v37 = vshrl.u32 %v36, 7
    %v38 = vsub.s32 0, %v37
    %v39 = vrot.slane %v25, %v38
    %v40 = vmul.f32 %v29, %v39
    %v41 = vmul.f32 %v34, %v39
    %v42 = vld [vmem:[%s2 + $0x20] sm:$0x1]
    %v43 = vlaneseq
    %v44 = vshrl.u32 %v43, 7
    %v45 = vsub.s32 0, %v44
    %v46 = vrot.slane %v42, %v45
    %v47 = vadd.f32 %v40, %v46
    %v48 = vadd.f32 %v41, %v46
    %v49 = vld [vmem:[%s2] sm:$0xff]
    %v50 = vld [vmem:[%s2 + $0x8] sm:$0xff]
    %v51 = vld [vmem:[%s2 + $0x18] sm:$0x1]
    %v52 = vlaneseq
    %v53 = vshrl.u32 %v52, 7
    %v54 = vsub.s32 0, %v53
    %v55 = vrot.slane %v51, %v54
    %vm56 = vcmask 130048
    %v58 = vsel %vm56, %v21, 0
    %v61 = vsel %vm56, %v22, 0
    %63 = vmatprep.subr.mxu0 0.0
    %64 = vmatpush1.msra.mxu0 0.0
    %65 = vmatprep.subr.mxu0 0.0
    %66 = vmatpush1.msra.mxu0 0.0
    %67 = vmatprep.subr.mxu0 0.0
    %68 = vmatpush1.msra.mxu0 0.0
    %69 = vmatprep.subr.mxu0 0.0
    %70 = vmatpush1.msra.mxu0 0.0
    %71 = vmatprep.subr.mxu0 0.0
    %72 = vmatpush1.msra.mxu0 0.0
    %73 = vmatprep.subr.mxu0 0.0
    %74 = vmatpush1.msra.mxu0 0.0
    %75 = vmatprep.subr.mxu0 0.0
    %76 = vmatpush1.msra.mxu0 0.0
    %77 = vmatprep.subr.mxu0 0.0
    %78 = vmatpush1.msra.mxu0 0.0
    %79 = vmatprep.subr.mxu0 0.0
    %80 = vmatpush1.msra.mxu0 0.0
    %81 = vmatprep.subr.mxu0 0.0
    %82 = vmatpush1.msra.mxu0 0.0
    %83 = vmatprep.subr.mxu0 0.0
    %84 = vmatpush1.msra.mxu0 0.0
    %85 = vmatprep.subr.mxu0 0.0
    %86 = vmatpush1.msra.mxu0 0.0
    %87 = vmatprep.subr.mxu0 0.0
    %88 = vmatpush1.msra.mxu0 0.0
    %89 = vmatprep.subr.mxu0 0.0
    %90 = vmatpush1.msra.mxu0 0.0
    %91 = vmatprep.subr.mxu0 0.0
    %92 = vmatpush1.msra.mxu0 %v50
    %93 = vmatprep.subr.mxu0 0.0
    %94 = vmatpush1.msra.mxu0 %v49
    %95 = vmatprep.subr.mxu0 0.0
    %96 = vmatpush2.msra.mxu0 0.0
    %97 = vmatprep.subr.mxu0 0.0
    %98 = vmatpush2.msra.mxu0 0.0
    %99 = vmatprep.subr.mxu0 0.0
    %100 = vmatpush2.msra.mxu0 0.0
    %101 = vmatprep.subr.mxu0 0.0
    %102 = vmatpush2.msra.mxu0 0.0
    %103 = vmatprep.subr.mxu0 0.0
    %104 = vmatpush2.msra.mxu0 0.0
    %105 = vmatprep.subr.mxu0 0.0
    %106 = vmatpush2.msra.mxu0 0.0
    %107 = vmatprep.subr.mxu0 0.0
    %108 = vmatpush2.msra.mxu0 0.0
    %109 = vmatprep.subr.mxu0 0.0
    %110 = vmatpush2.msra.mxu0 0.0
    %111 = vmatprep.subr.mxu0 0.0
    %112 = vmatpush2.msra.mxu0 0.0
    %113 = vmatprep.subr.mxu0 0.0
    %114 = vmatpush2.msra.mxu0 0.0
    %115 = vmatprep.subr.mxu0 0.0
    %116 = vmatpush2.msra.mxu0 0.0
    %117 = vmatprep.subr.mxu0 0.0
    %118 = vmatpush2.msra.mxu0 0.0
    %119 = vmatprep.subr.mxu0 0.0
    %120 = vmatpush2.msra.mxu0 0.0
    %121 = vmatprep.subr.mxu0 0.0
    %122 = vmatpush2.msra.mxu0 0.0
    %123 = vmatprep.subr.mxu0 0.0
    %124 = vmatpush2.msra.mxu0 0.0
    %125 = vmatprep.subr.mxu0 0.0
    %126 = vmatpush2.msra.mxu0 0.0
    %127 = vmatprep.mubr.f32.mxu0 0.0
    %128 = vmatmul.mubr.f32.gmra.mxu0 %v58
    %v129 = vpop.f32.mrf.mxu0
    %v130 = vadd.f32 %v55, %v129
    %v131 = vpop.f32.mrf.mxu0
    %132 = vmatprep.mubr.f32.mxu0 0.0
    %133 = vmatmul.mubr.f32.gmra.mxu0 %v61
    %v134 = vpop.f32.mrf.mxu0
    %v135 = vadd.f32 %v55, %v134
    %v136 = vpop.f32.mrf.mxu0
    %137 = vdwg.mxu0
    %v138 = vadd.f32 %v130, %v47
    %v139 = vadd.f32 %v135, %v48
    %v140 = vld [vmem:[%s2 + $0x28] sm:$0xff]
    %v141 = vld [vmem:[%s2 + $0x30] sm:$0xff]
    %v142 = vld [vmem:[%s2 + $0x38] sm:$0xff]
    %v143 = vld [vmem:[%s2 + $0x40] sm:$0xff]
    %v144 = vld [vmem:[%s2 + $0x48] sm:$0x1]
    %v145 = vlaneseq
    %v146 = vshrl.u32 %v145, 7
    %v147 = vsub.s32 0, %v146
    %v148 = vrot.slane %v144, %v147
    %vm149 = vcmask 261120
    %v151 = vsel %vm149, %v138, 0
    %v154 = vsel %vm149, %v139, 0
    %156 = vmatprep.subr.mxu0 0.0
    %157 = vmatpush1.msra.mxu0 0.0
    %158 = vmatprep.subr.mxu0 0.0
    %159 = vmatpush1.msra.mxu0 0.0
    %160 = vmatprep.subr.mxu0 0.0
    %161 = vmatpush1.msra.mxu0 0.0
    %162 = vmatprep.subr.mxu0 0.0
    %163 = vmatpush1.msra.mxu0 0.0
    %164 = vmatprep.subr.mxu0 0.0
    %165 = vmatpush1.msra.mxu0 0.0
    %166 = vmatprep.subr.mxu0 0.0
    %167 = vmatpush1.msra.mxu0 0.0
    %168 = vmatprep.subr.mxu0 0.0
    %169 = vmatpush1.msra.mxu0 0.0
    %170 = vmatprep.subr.mxu0 0.0
    %171 = vmatpush1.msra.mxu0 0.0
    %172 = vmatprep.subr.mxu0 0.0
    %173 = vmatpush1.msra.mxu0 0.0
    %174 = vmatprep.subr.mxu0 0.0
    %175 = vmatpush1.msra.mxu0 0.0
    %176 = vmatprep.subr.mxu0 0.0
    %177 = vmatpush1.msra.mxu0 0.0
    %178 = vmatprep.subr.mxu0 0.0
    %179 = vmatpush1.msra.mxu0 0.0
    %180 = vmatprep.subr.mxu0 0.0
    %181 = vmatpush1.msra.mxu0 %v143
    %182 = vmatprep.subr.mxu0 0.0
    %183 = vmatpush1.msra.mxu0 %v142
    %184 = vmatprep.subr.mxu0 0.0
    %185 = vmatpush1.msra.mxu0 %v141
    %186 = vmatprep.subr.mxu0 0.0
    %187 = vmatpush1.msra.mxu0 %v140
    %188 = vmatprep.subr.mxu0 0.0
    %189 = vmatpush2.msra.mxu0 0.0
    %190 = vmatprep.subr.mxu0 0.0
    %191 = vmatpush2.msra.mxu0 0.0
    %192 = vmatprep.subr.mxu0 0.0
    %193 = vmatpush2.msra.mxu0 0.0
    %194 = vmatprep.subr.mxu0 0.0
    %195 = vmatpush2.msra.mxu0 0.0
    %196 = vmatprep.subr.mxu0 0.0
    %197 = vmatpush2.msra.mxu0 0.0
    %198 = vmatprep.subr.mxu0 0.0
    %199 = vmatpush2.msra.mxu0 0.0
    %200 = vmatprep.subr.mxu0 0.0
    %201 = vmatpush2.msra.mxu0 0.0
    %202 = vmatprep.subr.mxu0 0.0
    %203 = vmatpush2.msra.mxu0 0.0
    %204 = vmatprep.subr.mxu0 0.0
    %205 = vmatpush2.msra.mxu0 0.0
    %206 = vmatprep.subr.mxu0 0.0
    %207 = vmatpush2.msra.mxu0 0.0
    %208 = vmatprep.subr.mxu0 0.0
    %209 = vmatpush2.msra.mxu0 0.0
    %210 = vmatprep.subr.mxu0 0.0
    %211 = vmatpush2.msra.mxu0 0.0
    %212 = vmatprep.subr.mxu0 0.0
    %213 = vmatpush2.msra.mxu0 0.0
    %214 = vmatprep.subr.mxu0 0.0
    %215 = vmatpush2.msra.mxu0 0.0
    %216 = vmatprep.subr.mxu0 0.0
    %217 = vmatpush2.msra.mxu0 0.0
    %218 = vmatprep.subr.mxu0 0.0
    %219 = vmatpush2.msra.mxu0 0.0
    %220 = vmatprep.mubr.f32.mxu0 0.0
    %221 = vmatmul.mubr.f32.gmra.mxu0 %v151
    %v222 = vpop.f32.mrf.mxu0
    %v223 = vadd.f32 %v148, %v222
    %v224 = vpop.f32.mrf.mxu0
    %225 = vmatprep.mubr.f32.mxu0 0.0
    %226 = vmatmul.mubr.f32.gmra.mxu0 %v154
    %v227 = vpop.f32.mrf.mxu0
    %v228 = vadd.f32 %v148, %v227
    %v229 = vpop.f32.mrf.mxu0
    %230 = vdwg.mxu0
    %v231 = vld [vmem:[%s2 + $0x50] sm:$0xff]
    %v232 = vld [vmem:[%s2 + $0x58] sm:$0xff]
    %v233 = vld [vmem:[%s2 + $0x60] sm:$0xff]
    %v234 = vld [vmem:[%s2 + $0x68] sm:$0xff]
    %v235 = vld [vmem:[%s2 + $0x70] sm:$0x1]
    %v236 = vlaneseq
    %v237 = vshrl.u32 %v236, 7
    %v238 = vsub.s32 0, %v237
    %v239 = vrot.slane %v235, %v238
    %v241 = vsel %vm149, %v223, 0
    %v244 = vsel %vm149, %v228, 0
    %246 = vmatprep.subr.mxu0 0.0
    %247 = vmatpush1.msra.mxu0 0.0
    %248 = vmatprep.subr.mxu0 0.0
    %249 = vmatpush1.msra.mxu0 0.0
    %250 = vmatprep.subr.mxu0 0.0
    %251 = vmatpush1.msra.mxu0 0.0
    %252 = vmatprep.subr.mxu0 0.0
    %253 = vmatpush1.msra.mxu0 0.0
    %254 = vmatprep.subr.mxu0 0.0
    %255 = vmatpush1.msra.mxu0 0.0
    %256 = vmatprep.subr.mxu0 0.0
    %257 = vmatpush1.msra.mxu0 0.0
    %258 = vmatprep.subr.mxu0 0.0
    %259 = vmatpush1.msra.mxu0 0.0
    %260 = vmatprep.subr.mxu0 0.0
    %261 = vmatpush1.msra.mxu0 0.0
    %262 = vmatprep.subr.mxu0 0.0
    %263 = vmatpush1.msra.mxu0 0.0
    %264 = vmatprep.subr.mxu0 0.0
    %265 = vmatpush1.msra.mxu0 0.0
    %266 = vmatprep.subr.mxu0 0.0
    %267 = vmatpush1.msra.mxu0 0.0
    %268 = vmatprep.subr.mxu0 0.0
    %269 = vmatpush1.msra.mxu0 0.0
    %270 = vmatprep.subr.mxu0 0.0
    %271 = vmatpush1.msra.mxu0 %v234
    %272 = vmatprep.subr.mxu0 0.0
    %273 = vmatpush1.msra.mxu0 %v233
    %274 = vmatprep.subr.mxu0 0.0
    %275 = vmatpush1.msra.mxu0 %v232
    %276 = vmatprep.subr.mxu0 0.0
    %277 = vmatpush1.msra.mxu0 %v231
    %278 = vmatprep.subr.mxu0 0.0
    %279 = vmatpush2.msra.mxu0 0.0
    %280 = vmatprep.subr.mxu0 0.0
    %281 = vmatpush2.msra.mxu0 0.0
    %282 = vmatprep.subr.mxu0 0.0
    %283 = vmatpush2.msra.mxu0 0.0
    %284 = vmatprep.subr.mxu0 0.0
    %285 = vmatpush2.msra.mxu0 0.0
    %286 = vmatprep.subr.mxu0 0.0
    %287 = vmatpush2.msra.mxu0 0.0
    %288 = vmatprep.subr.mxu0 0.0
    %289 = vmatpush2.msra.mxu0 0.0
    %290 = vmatprep.subr.mxu0 0.0
    %291 = vmatpush2.msra.mxu0 0.0
    %292 = vmatprep.subr.mxu0 0.0
    %293 = vmatpush2.msra.mxu0 0.0
    %294 = vmatprep.subr.mxu0 0.0
    %295 = vmatpush2.msra.mxu0 0.0
    %296 = vmatprep.subr.mxu0 0.0
    %297 = vmatpush2.msra.mxu0 0.0
    %298 = vmatprep.subr.mxu0 0.0
    %299 = vmatpush2.msra.mxu0 0.0
    %300 = vmatprep.subr.mxu0 0.0
    %301 = vmatpush2.msra.mxu0 0.0
    %302 = vmatprep.subr.mxu0 0.0
    %303 = vmatpush2.msra.mxu0 0.0
    %304 = vmatprep.subr.mxu0 0.0
    %305 = vmatpush2.msra.mxu0 0.0
    %306 = vmatprep.subr.mxu0 0.0
    %307 = vmatpush2.msra.mxu0 0.0
    %308 = vmatprep.subr.mxu0 0.0
    %309 = vmatpush2.msra.mxu0 0.0
    %310 = vmatprep.mubr.f32.mxu0 0.0
    %311 = vmatmul.mubr.f32.gmra.mxu0 %v241
    %v312 = vpop.f32.mrf.mxu0
    %v313 = vadd.f32 %v239, %v312
    %v314 = vpop.f32.mrf.mxu0
    %315 = vmatprep.mubr.f32.mxu0 0.0
    %316 = vmatmul.mubr.f32.gmra.mxu0 %v244
    %v317 = vpop.f32.mrf.mxu0
    %v318 = vadd.f32 %v239, %v317
    %v319 = vpop.f32.mrf.mxu0
    %320 = vdwg.mxu0
    %v321 = vadd.f32 %v138, %v313
    %v322 = vadd.f32 %v139, %v318
    %v323 = vld [vmem:[%s2 + $0xc0] sm:$0x1]
    %v324 = vld [vmem:[%s2 + $0xc8] sm:$0x1]
    %v325 = vsel %vm149, %v321, 0.0
    %326 = vadd.xlane.f32.xlu0 %v325
    %v327 = vpop.xlane.xlu0 %326
    %v328 = vsel %vm149, %v322, 0.0
    %329 = vadd.xlane.f32.xlu0 %v328
    %v330 = vpop.xlane.xlu0 %329
    %v331 = vrcp.pop 32.0
    %v332 = vmul.f32 %v327, %v331
    %v333 = vmul.f32 %v330, %v331
    %v334 = vsub.f32 %v321, %v332
    %v335 = vsub.f32 %v322, %v333
    %v336 = vmul.f32 %v334, %v334
    %v337 = vmul.f32 %v335, %v335
    %v338 = vsel %vm149, %v336, 0.0
    %339 = vadd.xlane.f32.xlu0 %v338
    %v340 = vpop.xlane.xlu0 %339
    %v341 = vsel %vm149, %v337, 0.0
    %342 = vadd.xlane.f32.xlu0 %v341
    %v343 = vpop.xlane.xlu0 %342
    %v344 = vmul.f32 %v340, %v331
    %v345 = vmul.f32 %v343, %v331
    %v346 = vadd.f32 %v344, 1e-05
    %v347 = vadd.f32 %v345, 1e-05
    %v348 = vrsqrt.pop %v346
    %v349 = vrsqrt.pop %v347
    %v350 = vmul.f32 %v334, %v348
    %v351 = vmul.f32 %v335, %v349
    %v352 = vlaneseq
    %v353 = vshrl.u32 %v352, 7
    %v354 = vsub.s32 0, %v353
    %v355 = vrot.slane %v323, %v354
    %v356 = vmul.f32 %v350, %v355
    %v357 = vmul.f32 %v351, %v355
    %v358 = vlaneseq
    %v359 = vshrl.u32 %v358, 7
    %v360 = vsub.s32 0, %v359
    %v361 = vrot.slane %v324, %v360
    %v362 = vadd.f32 %v356, %v361
    %v363 = vadd.f32 %v357, %v361
    %v364 = vld [vmem:[%s3] sm:$0xff]
    %v365 = vld [vmem:[%s3 + $0x8] sm:$0xff]
    %v366 = vld [vmem:[%s3 + $0x10] sm:$0xff]
    %v367 = vld [vmem:[%s3 + $0x18] sm:$0xff]
    %v368 = vld [vmem:[%s3 + $0x20] sm:$0x1]
    %v369 = vlaneseq
    %v370 = vshrl.u32 %v369, 7
    %v371 = vsub.s32 0, %v370
    %v372 = vrot.slane %v368, %v371
    %v374 = vsel %vm149, %v362, 0
    %v377 = vsel %vm149, %v363, 0
    %379 = vmatprep.subr.mxu0 0.0
    %380 = vmatpush1.msra.mxu0 0.0
    %381 = vmatprep.subr.mxu0 0.0
    %382 = vmatpush1.msra.mxu0 0.0
    %383 = vmatprep.subr.mxu0 0.0
    %384 = vmatpush1.msra.mxu0 0.0
    %385 = vmatprep.subr.mxu0 0.0
    %386 = vmatpush1.msra.mxu0 0.0
    %387 = vmatprep.subr.mxu0 0.0
    %388 = vmatpush1.msra.mxu0 0.0
    %389 = vmatprep.subr.mxu0 0.0
    %390 = vmatpush1.msra.mxu0 0.0
    %391 = vmatprep.subr.mxu0 0.0
    %392 = vmatpush1.msra.mxu0 0.0
    %393 = vmatprep.subr.mxu0 0.0
    %394 = vmatpush1.msra.mxu0 0.0
    %395 = vmatprep.subr.mxu0 0.0
    %396 = vmatpush1.msra.mxu0 0.0
    %397 = vmatprep.subr.mxu0 0.0
    %398 = vmatpush1.msra.mxu0 0.0
    %399 = vmatprep.subr.mxu0 0.0
    %400 = vmatpush1.msra.mxu0 0.0
    %401 = vmatprep.subr.mxu0 0.0
    %402 = vmatpush1.msra.mxu0 0.0
    %403 = vmatprep.subr.mxu0 0.0
    %404 = vmatpush1.msra.mxu0 %v367
    %405 = vmatprep.subr.mxu0 0.0
    %406 = vmatpush1.msra.mxu0 %v366
    %407 = vmatprep.subr.mxu0 0.0
    %408 = vmatpush1.msra.mxu0 %v365
    %409 = vmatprep.subr.mxu0 0.0
    %410 = vmatpush1.msra.mxu0 %v364
    %411 = vmatprep.subr.mxu0 0.0
    %412 = vmatpush2.msra.mxu0 0.0
    %413 = vmatprep.subr.mxu0 0.0
    %414 = vmatpush2.msra.mxu0 0.0
    %415 = vmatprep.subr.mxu0 0.0
    %416 = vmatpush2.msra.mxu0 0.0
    %417 = vmatprep.subr.mxu0 0.0
    %418 = vmatpush2.msra.mxu0 0.0
    %419 = vmatprep.subr.mxu0 0.0
    %420 = vmatpush2.msra.mxu0 0.0
    %421 = vmatprep.subr.mxu0 0.0
    %422 = vmatpush2.msra.mxu0 0.0
    %423 = vmatprep.subr.mxu0 0.0
    %424 = vmatpush2.msra.mxu0 0.0
    %425 = vmatprep.subr.mxu0 0.0
    %426 = vmatpush2.msra.mxu0 0.0
    %427 = vmatprep.subr.mxu0 0.0
    %428 = vmatpush2.msra.mxu0 0.0
    %429 = vmatprep.subr.mxu0 0.0
    %430 = vmatpush2.msra.mxu0 0.0
    %431 = vmatprep.subr.mxu0 0.0
    %432 = vmatpush2.msra.mxu0 0.0
    %433 = vmatprep.subr.mxu0 0.0
    %434 = vmatpush2.msra.mxu0 0.0
    %435 = vmatprep.subr.mxu0 0.0
    %436 = vmatpush2.msra.mxu0 0.0
    %437 = vmatprep.subr.mxu0 0.0
    %438 = vmatpush2.msra.mxu0 0.0
    %439 = vmatprep.subr.mxu0 0.0
    %440 = vmatpush2.msra.mxu0 0.0
    %441 = vmatprep.subr.mxu0 0.0
    %442 = vmatpush2.msra.mxu0 0.0
    %443 = vmatprep.mubr.f32.mxu0 0.0
    %444 = vmatmul.mubr.f32.gmra.mxu0 %v374
    %v445 = vpop.f32.mrf.mxu0
    %v446 = vadd.f32 %v372, %v445
    %v447 = vpop.f32.mrf.mxu0
    %448 = vmatprep.mubr.f32.mxu0 0.0
    %449 = vmatmul.mubr.f32.gmra.mxu0 %v377
    %v450 = vpop.f32.mrf.mxu0
    %v451 = vadd.f32 %v372, %v450
    %v452 = vpop.f32.mrf.mxu0
    %453 = vdwg.mxu0
    %v454 = vmax.f32 %v446, 0.0
    %v455 = vmax.f32 %v451, 0.0
    %v456 = vld [vmem:[%s2 + $0x78] sm:$0xff]
    %v457 = vld [vmem:[%s2 + $0x80] sm:$0xff]
    %v458 = vld [vmem:[%s2 + $0x88] sm:$0xff]
    %v459 = vld [vmem:[%s2 + $0x90] sm:$0xff]
    %v460 = vld [vmem:[%s2 + $0x98] sm:$0xff]
    %v461 = vld [vmem:[%s2 + $0xa0] sm:$0xff]
    %v462 = vld [vmem:[%s2 + $0xa8] sm:$0xff]
    %v463 = vld [vmem:[%s2 + $0xb0] sm:$0xff]
    %v464 = vld [vmem:[%s2 + $0xb8] sm:$0x1]
    %v465 = vlaneseq
    %v466 = vshrl.u32 %v465, 7
    %v467 = vsub.s32 0, %v466
    %v468 = vrot.slane %v464, %v467
    %vm469 = vcmask 523264
    %v471 = vsel %vm469, %v454, 0
    %v474 = vsel %vm469, %v455, 0
    %476 = vmatprep.subr.mxu0 0.0
    %477 = vmatpush1.msra.mxu0 0.0
    %478 = vmatprep.subr.mxu0 0.0
    %479 = vmatpush1.msra.mxu0 0.0
    %480 = vmatprep.subr.mxu0 0.0
    %481 = vmatpush1.msra.mxu0 0.0
    %482 = vmatprep.subr.mxu0 0.0
    %483 = vmatpush1.msra.mxu0 0.0
    %484 = vmatprep.subr.mxu0 0.0
    %485 = vmatpush1.msra.mxu0 0.0
    %486 = vmatprep.subr.mxu0 0.0
    %487 = vmatpush1.msra.mxu0 0.0
    %488 = vmatprep.subr.mxu0 0.0
    %489 = vmatpush1.msra.mxu0 0.0
    %490 = vmatprep.subr.mxu0 0.0
    %491 = vmatpush1.msra.mxu0 0.0
    %492 = vmatprep.subr.mxu0 0.0
    %493 = vmatpush1.msra.mxu0 %v463
    %494 = vmatprep.subr.mxu0 0.0
    %495 = vmatpush1.msra.mxu0 %v462
    %496 = vmatprep.subr.mxu0 0.0
    %497 = vmatpush1.msra.mxu0 %v461
    %498 = vmatprep.subr.mxu0 0.0
    %499 = vmatpush1.msra.mxu0 %v460
    %500 = vmatprep.subr.mxu0 0.0
    %501 = vmatpush1.msra.mxu0 %v459
    %502 = vmatprep.subr.mxu0 0.0
    %503 = vmatpush1.msra.mxu0 %v458
    %504 = vmatprep.subr.mxu0 0.0
    %505 = vmatpush1.msra.mxu0 %v457
    %506 = vmatprep.subr.mxu0 0.0
    %507 = vmatpush1.msra.mxu0 %v456
    %508 = vmatprep.subr.mxu0 0.0
    %509 = vmatpush2.msra.mxu0 0.0
    %510 = vmatprep.subr.mxu0 0.0
    %511 = vmatpush2.msra.mxu0 0.0
    %512 = vmatprep.subr.mxu0 0.0
    %513 = vmatpush2.msra.mxu0 0.0
    %514 = vmatprep.subr.mxu0 0.0
    %515 = vmatpush2.msra.mxu0 0.0
    %516 = vmatprep.subr.mxu0 0.0
    %517 = vmatpush2.msra.mxu0 0.0
    %518 = vmatprep.subr.mxu0 0.0
    %519 = vmatpush2.msra.mxu0 0.0
    %520 = vmatprep.subr.mxu0 0.0
    %521 = vmatpush2.msra.mxu0 0.0
    %522 = vmatprep.subr.mxu0 0.0
    %523 = vmatpush2.msra.mxu0 0.0
    %524 = vmatprep.subr.mxu0 0.0
    %525 = vmatpush2.msra.mxu0 0.0
    %526 = vmatprep.subr.mxu0 0.0
    %527 = vmatpush2.msra.mxu0 0.0
    %528 = vmatprep.subr.mxu0 0.0
    %529 = vmatpush2.msra.mxu0 0.0
    %530 = vmatprep.subr.mxu0 0.0
    %531 = vmatpush2.msra.mxu0 0.0
    %532 = vmatprep.subr.mxu0 0.0
    %533 = vmatpush2.msra.mxu0 0.0
    %534 = vmatprep.subr.mxu0 0.0
    %535 = vmatpush2.msra.mxu0 0.0
    %536 = vmatprep.subr.mxu0 0.0
    %537 = vmatpush2.msra.mxu0 0.0
    %538 = vmatprep.subr.mxu0 0.0
    %539 = vmatpush2.msra.mxu0 0.0
    %540 = vmatprep.mubr.f32.mxu0 0.0
    %541 = vmatmul.mubr.f32.gmra.mxu0 %v471
    %v542 = vpop.f32.mrf.mxu0
    %v543 = vadd.f32 %v468, %v542
    %v544 = vpop.f32.mrf.mxu0
    %545 = vmatprep.mubr.f32.mxu0 0.0
    %546 = vmatmul.mubr.f32.gmra.mxu0 %v474
    %v547 = vpop.f32.mrf.mxu0
    %v548 = vadd.f32 %v468, %v547
    %v549 = vpop.f32.mrf.mxu0
    %550 = vdwg.mxu0
    %v551 = vadd.f32 %v138, %v543
    %v552 = vadd.f32 %v139, %v548
    %v553 = vld [vmem:[%s2 + $0xd0] sm:$0x1]
    %v554 = vld [vmem:[%s2 + $0xd8] sm:$0x1]
    %v555 = vsel %vm149, %v551, 0.0
    %556 = vadd.xlane.f32.xlu0 %v555
    %v557 = vpop.xlane.xlu0 %556
    %v558 = vsel %vm149, %v552, 0.0
    %559 = vadd.xlane.f32.xlu0 %v558
    %v560 = vpop.xlane.xlu0 %559
    %v561 = vmul.f32 %v557, %v331
    %v562 = vmul.f32 %v560, %v331
    %v563 = vsub.f32 %v551, %v561
    %v564 = vsub.f32 %v552, %v562
    %v565 = vmul.f32 %v563, %v563
    %v566 = vmul.f32 %v564, %v564
    %v567 = vsel %vm149, %v565, 0.0
    %568 = vadd.xlane.f32.xlu0 %v567
    %v569 = vpop.xlane.xlu0 %568
    %v570 = vsel %vm149, %v566, 0.0
    %571 = vadd.xlane.f32.xlu0 %v570
    %v572 = vpop.xlane.xlu0 %571
    %v573 = vmul.f32 %v569, %v331
    %v574 = vmul.f32 %v572, %v331
    %v575 = vadd.f32 %v573, 1e-05
    %v576 = vadd.f32 %v574, 1e-05
    %v577 = vrsqrt.pop %v575
    %v578 = vrsqrt.pop %v576
    %v579 = vmul.f32 %v563, %v577
    %v580 = vmul.f32 %v564, %v578
    %v581 = vlaneseq
    %v582 = vshrl.u32 %v581, 7
    %v583 = vsub.s32 0, %v582
    %v584 = vrot.slane %v553, %v583
    %v585 = vmul.f32 %v579, %v584
    %v586 = vmul.f32 %v580, %v584
    %v587 = vlaneseq
    %v588 = vshrl.u32 %v587, 7
    %v589 = vsub.s32 0, %v588
    %v590 = vrot.slane %v554, %v589
    %v591 = vadd.f32 %v585, %v590
    %v592 = vadd.f32 %v586, %v590
    %v593 = vld [vmem:[%s2 + $0xe0] sm:$0xff]
    %v594 = vld [vmem:[%s2 + $0xe8] sm:$0xff]
    %v595 = vld [vmem:[%s2 + $0xf0] sm:$0xff]
    %v596 = vld [vmem:[%s2 + $0xf8] sm:$0xff]
    %v597 = vld [vmem:[%s2 + $0x100] sm:$0x1]
    %v598 = vlaneseq
    %v599 = vshrl.u32 %v598, 7
    %v600 = vsub.s32 0, %v599
    %v601 = vrot.slane %v597, %v600
    %v603 = vsel %vm149, %v591, 0
    %v606 = vsel %vm149, %v592, 0
    %608 = vmatprep.subr.mxu0 0.0
    %609 = vmatpush1.msra.mxu0 0.0
    %610 = vmatprep.subr.mxu0 0.0
    %611 = vmatpush1.msra.mxu0 0.0
    %612 = vmatprep.subr.mxu0 0.0
    %613 = vmatpush1.msra.mxu0 0.0
    %614 = vmatprep.subr.mxu0 0.0
    %615 = vmatpush1.msra.mxu0 0.0
    %616 = vmatprep.subr.mxu0 0.0
    %617 = vmatpush1.msra.mxu0 0.0
    %618 = vmatprep.subr.mxu0 0.0
    %619 = vmatpush1.msra.mxu0 0.0
    %620 = vmatprep.subr.mxu0 0.0
    %621 = vmatpush1.msra.mxu0 0.0
    %622 = vmatprep.subr.mxu0 0.0
    %623 = vmatpush1.msra.mxu0 0.0
    %624 = vmatprep.subr.mxu0 0.0
    %625 = vmatpush1.msra.mxu0 0.0
    %626 = vmatprep.subr.mxu0 0.0
    %627 = vmatpush1.msra.mxu0 0.0
    %628 = vmatprep.subr.mxu0 0.0
    %629 = vmatpush1.msra.mxu0 0.0
    %630 = vmatprep.subr.mxu0 0.0
    %631 = vmatpush1.msra.mxu0 0.0
    %632 = vmatprep.subr.mxu0 0.0
    %633 = vmatpush1.msra.mxu0 %v596
    %634 = vmatprep.subr.mxu0 0.0
    %635 = vmatpush1.msra.mxu0 %v595
    %636 = vmatprep.subr.mxu0 0.0
    %637 = vmatpush1.msra.mxu0 %v594
    %638 = vmatprep.subr.mxu0 0.0
    %639 = vmatpush1.msra.mxu0 %v593
    %640 = vmatprep.subr.mxu0 0.0
    %641 = vmatpush2.msra.mxu0 0.0
    %642 = vmatprep.subr.mxu0 0.0
    %643 = vmatpush2.msra.mxu0 0.0
    %644 = vmatprep.subr.mxu0 0.0
    %645 = vmatpush2.msra.mxu0 0.0
    %646 = vmatprep.subr.mxu0 0.0
    %647 = vmatpush2.msra.mxu0 0.0
    %648 = vmatprep.subr.mxu0 0.0
    %649 = vmatpush2.msra.mxu0 0.0
    %650 = vmatprep.subr.mxu0 0.0
    %651 = vmatpush2.msra.mxu0 0.0
    %652 = vmatprep.subr.mxu0 0.0
    %653 = vmatpush2.msra.mxu0 0.0
    %654 = vmatprep.subr.mxu0 0.0
    %655 = vmatpush2.msra.mxu0 0.0
    %656 = vmatprep.subr.mxu0 0.0
    %657 = vmatpush2.msra.mxu0 0.0
    %658 = vmatprep.subr.mxu0 0.0
    %659 = vmatpush2.msra.mxu0 0.0
    %660 = vmatprep.subr.mxu0 0.0
    %661 = vmatpush2.msra.mxu0 0.0
    %662 = vmatprep.subr.mxu0 0.0
    %663 = vmatpush2.msra.mxu0 0.0
    %664 = vmatprep.subr.mxu0 0.0
    %665 = vmatpush2.msra.mxu0 0.0
    %666 = vmatprep.subr.mxu0 0.0
    %667 = vmatpush2.msra.mxu0 0.0
    %668 = vmatprep.subr.mxu0 0.0
    %669 = vmatpush2.msra.mxu0 0.0
    %670 = vmatprep.subr.mxu0 0.0
    %671 = vmatpush2.msra.mxu0 0.0
    %672 = vmatprep.mubr.f32.mxu0 0.0
    %673 = vmatmul.mubr.f32.gmra.mxu0 %v603
    %v674 = vpop.f32.mrf.mxu0
    %v675 = vadd.f32 %v601, %v674
    %v676 = vpop.f32.mrf.mxu0
    %677 = vmatprep.mubr.f32.mxu0 0.0
    %678 = vmatmul.mubr.f32.gmra.mxu0 %v606
    %v679 = vpop.f32.mrf.mxu0
    %v680 = vadd.f32 %v601, %v679
    %v681 = vpop.f32.mrf.mxu0
    %682 = vdwg.mxu0
    %v683 = vld [vmem:[%s2 + $0x108] sm:$0xff]
    %v684 = vld [vmem:[%s2 + $0x110] sm:$0xff]
    %v685 = vld [vmem:[%s2 + $0x118] sm:$0xff]
    %v686 = vld [vmem:[%s2 + $0x120] sm:$0xff]
    %v687 = vld [vmem:[%s2 + $0x128] sm:$0x1]
    %v688 = vlaneseq
    %v689 = vshrl.u32 %v688, 7
    %v690 = vsub.s32 0, %v689
    %v691 = vrot.slane %v687, %v690
    %v693 = vsel %vm149, %v675, 0
    %v696 = vsel %vm149, %v680, 0
    %698 = vmatprep.subr.mxu0 0.0
    %699 = vmatpush1.msra.mxu0 0.0
    %700 = vmatprep.subr.mxu0 0.0
    %701 = vmatpush1.msra.mxu0 0.0
    %702 = vmatprep.subr.mxu0 0.0
    %703 = vmatpush1.msra.mxu0 0.0
    %704 = vmatprep.subr.mxu0 0.0
    %705 = vmatpush1.msra.mxu0 0.0
    %706 = vmatprep.subr.mxu0 0.0
    %707 = vmatpush1.msra.mxu0 0.0
    %708 = vmatprep.subr.mxu0 0.0
    %709 = vmatpush1.msra.mxu0 0.0
    %710 = vmatprep.subr.mxu0 0.0
    %711 = vmatpush1.msra.mxu0 0.0
    %712 = vmatprep.subr.mxu0 0.0
    %713 = vmatpush1.msra.mxu0 0.0
    %714 = vmatprep.subr.mxu0 0.0
    %715 = vmatpush1.msra.mxu0 0.0
    %716 = vmatprep.subr.mxu0 0.0
    %717 = vmatpush1.msra.mxu0 0.0
    %718 = vmatprep.subr.mxu0 0.0
    %719 = vmatpush1.msra.mxu0 0.0
    %720 = vmatprep.subr.mxu0 0.0
    %721 = vmatpush1.msra.mxu0 0.0
    %722 = vmatprep.subr.mxu0 0.0
    %723 = vmatpush1.msra.mxu0 %v686
    %724 = vmatprep.subr.mxu0 0.0
    %725 = vmatpush1.msra.mxu0 %v685
    %726 = vmatprep.subr.mxu0 0.0
    %727 = vmatpush1.msra.mxu0 %v684
    %728 = vmatprep.subr.mxu0 0.0
    %729 = vmatpush1.msra.mxu0 %v683
    %730 = vmatprep.subr.mxu0 0.0
    %731 = vmatpush2.msra.mxu0 0.0
    %732 = vmatprep.subr.mxu0 0.0
    %733 = vmatpush2.msra.mxu0 0.0
    %734 = vmatprep.subr.mxu0 0.0
    %735 = vmatpush2.msra.mxu0 0.0
    %736 = vmatprep.subr.mxu0 0.0
    %737 = vmatpush2.msra.mxu0 0.0
    %738 = vmatprep.subr.mxu0 0.0
    %739 = vmatpush2.msra.mxu0 0.0
    %740 = vmatprep.subr.mxu0 0.0
    %741 = vmatpush2.msra.mxu0 0.0
    %742 = vmatprep.subr.mxu0 0.0
    %743 = vmatpush2.msra.mxu0 0.0
    %744 = vmatprep.subr.mxu0 0.0
    %745 = vmatpush2.msra.mxu0 0.0
    %746 = vmatprep.subr.mxu0 0.0
    %747 = vmatpush2.msra.mxu0 0.0
    %748 = vmatprep.subr.mxu0 0.0
    %749 = vmatpush2.msra.mxu0 0.0
    %750 = vmatprep.subr.mxu0 0.0
    %751 = vmatpush2.msra.mxu0 0.0
    %752 = vmatprep.subr.mxu0 0.0
    %753 = vmatpush2.msra.mxu0 0.0
    %754 = vmatprep.subr.mxu0 0.0
    %755 = vmatpush2.msra.mxu0 0.0
    %756 = vmatprep.subr.mxu0 0.0
    %757 = vmatpush2.msra.mxu0 0.0
    %758 = vmatprep.subr.mxu0 0.0
    %759 = vmatpush2.msra.mxu0 0.0
    %760 = vmatprep.subr.mxu0 0.0
    %761 = vmatpush2.msra.mxu0 0.0
    %762 = vmatprep.mubr.f32.mxu0 0.0
    %763 = vmatmul.mubr.f32.gmra.mxu0 %v693
    %v764 = vpop.f32.mrf.mxu0
    %v765 = vadd.f32 %v691, %v764
    %v766 = vpop.f32.mrf.mxu0
    %767 = vmatprep.mubr.f32.mxu0 0.0
    %768 = vmatmul.mubr.f32.gmra.mxu0 %v696
    %v769 = vpop.f32.mrf.mxu0
    %v770 = vadd.f32 %v691, %v769
    %v771 = vpop.f32.mrf.mxu0
    %772 = vdwg.mxu0
    %v773 = vadd.f32 %v591, %v765
    %v774 = vadd.f32 %v592, %v770
    %v775 = vld [vmem:[%s2 + $0x178] sm:$0x1]
    %v776 = vld [vmem:[%s2 + $0x180] sm:$0x1]
    %v777 = vsel %vm149, %v773, 0.0
    %778 = vadd.xlane.f32.xlu0 %v777
    %v779 = vpop.xlane.xlu0 %778
    %v780 = vsel %vm149, %v774, 0.0
    %781 = vadd.xlane.f32.xlu0 %v780
    %v782 = vpop.xlane.xlu0 %781
    %v783 = vmul.f32 %v779, %v331
    %v784 = vmul.f32 %v782, %v331
    %v785 = vsub.f32 %v773, %v783
    %v786 = vsub.f32 %v774, %v784
    %v787 = vmul.f32 %v785, %v785
    %v788 = vmul.f32 %v786, %v786
    %v789 = vsel %vm149, %v787, 0.0
    %790 = vadd.xlane.f32.xlu0 %v789
    %v791 = vpop.xlane.xlu0 %790
    %v792 = vsel %vm149, %v788, 0.0
    %793 = vadd.xlane.f32.xlu0 %v792
    %v794 = vpop.xlane.xlu0 %793
    %v795 = vmul.f32 %v791, %v331
    %v796 = vmul.f32 %v794, %v331
    %v797 = vadd.f32 %v795, 1e-05
    %v798 = vadd.f32 %v796, 1e-05
    %v799 = vrsqrt.pop %v797
    %v800 = vrsqrt.pop %v798
    %v801 = vmul.f32 %v785, %v799
    %v802 = vmul.f32 %v786, %v800
    %v803 = vlaneseq
    %v804 = vshrl.u32 %v803, 7
    %v805 = vsub.s32 0, %v804
    %v806 = vrot.slane %v775, %v805
    %v807 = vmul.f32 %v801, %v806
    %v808 = vmul.f32 %v802, %v806
    %v809 = vlaneseq
    %v810 = vshrl.u32 %v809, 7
    %v811 = vsub.s32 0, %v810
    %v812 = vrot.slane %v776, %v811
    %v813 = vadd.f32 %v807, %v812
    %v814 = vadd.f32 %v808, %v812
    %v815 = vld [vmem:[%s3 + $0x28] sm:$0xff]
    %v816 = vld [vmem:[%s3 + $0x30] sm:$0xff]
    %v817 = vld [vmem:[%s3 + $0x38] sm:$0xff]
    %v818 = vld [vmem:[%s3 + $0x40] sm:$0xff]
    %v819 = vld [vmem:[%s3 + $0x48] sm:$0x1]
    %v820 = vlaneseq
    %v821 = vshrl.u32 %v820, 7
    %v822 = vsub.s32 0, %v821
    %v823 = vrot.slane %v819, %v822
    %v825 = vsel %vm149, %v813, 0
    %v828 = vsel %vm149, %v814, 0
    %830 = vmatprep.subr.mxu0 0.0
    %831 = vmatpush1.msra.mxu0 0.0
    %832 = vmatprep.subr.mxu0 0.0
    %833 = vmatpush1.msra.mxu0 0.0
    %834 = vmatprep.subr.mxu0 0.0
    %835 = vmatpush1.msra.mxu0 0.0
    %836 = vmatprep.subr.mxu0 0.0
    %837 = vmatpush1.msra.mxu0 0.0
    %838 = vmatprep.subr.mxu0 0.0
    %839 = vmatpush1.msra.mxu0 0.0
    %840 = vmatprep.subr.mxu0 0.0
    %841 = vmatpush1.msra.mxu0 0.0
    %842 = vmatprep.subr.mxu0 0.0
    %843 = vmatpush1.msra.mxu0 0.0
    %844 = vmatprep.subr.mxu0 0.0
    %845 = vmatpush1.msra.mxu0 0.0
    %846 = vmatprep.subr.mxu0 0.0
    %847 = vmatpush1.msra.mxu0 0.0
    %848 = vmatprep.subr.mxu0 0.0
    %849 = vmatpush1.msra.mxu0 0.0
    %850 = vmatprep.subr.mxu0 0.0
    %851 = vmatpush1.msra.mxu0 0.0
    %852 = vmatprep.subr.mxu0 0.0
    %853 = vmatpush1.msra.mxu0 0.0
    %854 = vmatprep.subr.mxu0 0.0
    %855 = vmatpush1.msra.mxu0 %v818
    %856 = vmatprep.subr.mxu0 0.0
    %857 = vmatpush1.msra.mxu0 %v817
    %858 = vmatprep.subr.mxu0 0.0
    %859 = vmatpush1.msra.mxu0 %v816
    %860 = vmatprep.subr.mxu0 0.0
    %861 = vmatpush1.msra.mxu0 %v815
    %862 = vmatprep.subr.mxu0 0.0
    %863 = vmatpush2.msra.mxu0 0.0
    %864 = vmatprep.subr.mxu0 0.0
    %865 = vmatpush2.msra.mxu0 0.0
    %866 = vmatprep.subr.mxu0 0.0
    %867 = vmatpush2.msra.mxu0 0.0
    %868 = vmatprep.subr.mxu0 0.0
    %869 = vmatpush2.msra.mxu0 0.0
    %870 = vmatprep.subr.mxu0 0.0
    %871 = vmatpush2.msra.mxu0 0.0
    %872 = vmatprep.subr.mxu0 0.0
    %873 = vmatpush2.msra.mxu0 0.0
    %874 = vmatprep.subr.mxu0 0.0
    %875 = vmatpush2.msra.mxu0 0.0
    %876 = vmatprep.subr.mxu0 0.0
    %877 = vmatpush2.msra.mxu0 0.0
    %878 = vmatprep.subr.mxu0 0.0
    %879 = vmatpush2.msra.mxu0 0.0
    %880 = vmatprep.subr.mxu0 0.0
    %881 = vmatpush2.msra.mxu0 0.0
    %882 = vmatprep.subr.mxu0 0.0
    %883 = vmatpush2.msra.mxu0 0.0
    %884 = vmatprep.subr.mxu0 0.0
    %885 = vmatpush2.msra.mxu0 0.0
    %886 = vmatprep.subr.mxu0 0.0
    %887 = vmatpush2.msra.mxu0 0.0
    %888 = vmatprep.subr.mxu0 0.0
    %889 = vmatpush2.msra.mxu0 0.0
    %890 = vmatprep.subr.mxu0 0.0
    %891 = vmatpush2.msra.mxu0 0.0
    %892 = vmatprep.subr.mxu0 0.0
    %893 = vmatpush2.msra.mxu0 0.0
    %894 = vmatprep.mubr.f32.mxu0 0.0
    %895 = vmatmul.mubr.f32.gmra.mxu0 %v825
    %v896 = vpop.f32.mrf.mxu0
    %v897 = vadd.f32 %v823, %v896
    %v898 = vpop.f32.mrf.mxu0
    %899 = vmatprep.mubr.f32.mxu0 0.0
    %900 = vmatmul.mubr.f32.gmra.mxu0 %v828
    %v901 = vpop.f32.mrf.mxu0
    %v902 = vadd.f32 %v823, %v901
    %v903 = vpop.f32.mrf.mxu0
    %904 = vdwg.mxu0
    %v905 = vmax.f32 %v897, 0.0
    %v906 = vmax.f32 %v902, 0.0
    %v907 = vld [vmem:[%s2 + $0x130] sm:$0xff]
    %v908 = vld [vmem:[%s2 + $0x138] sm:$0xff]
    %v909 = vld [vmem:[%s2 + $0x140] sm:$0xff]
    %v910 = vld [vmem:[%s2 + $0x148] sm:$0xff]
    %v911 = vld [vmem:[%s2 + $0x150] sm:$0xff]
    %v912 = vld [vmem:[%s2 + $0x158] sm:$0xff]
    %v913 = vld [vmem:[%s2 + $0x160] sm:$0xff]
    %v914 = vld [vmem:[%s2 + $0x168] sm:$0xff]
    %v915 = vld [vmem:[%s2 + $0x170] sm:$0x1]
    %v916 = vlaneseq
    %v917 = vshrl.u32 %v916, 7
    %v918 = vsub.s32 0, %v917
    %v919 = vrot.slane %v915, %v918
    %v921 = vsel %vm469, %v905, 0
    %v924 = vsel %vm469, %v906, 0
    %926 = vmatprep.subr.mxu0 0.0
    %927 = vmatpush1.msra.mxu0 0.0
    %928 = vmatprep.subr.mxu0 0.0
    %929 = vmatpush1.msra.mxu0 0.0
    %930 = vmatprep.subr.mxu0 0.0
    %931 = vmatpush1.msra.mxu0 0.0
    %932 = vmatprep.subr.mxu0 0.0
    %933 = vmatpush1.msra.mxu0 0.0
    %934 = vmatprep.subr.mxu0 0.0
    %935 = vmatpush1.msra.mxu0 0.0
    %936 = vmatprep.subr.mxu0 0.0
    %937 = vmatpush1.msra.mxu0 0.0
    %938 = vmatprep.subr.mxu0 0.0
    %939 = vmatpush1.msra.mxu0 0.0
    %940 = vmatprep.subr.mxu0 0.0
    %941 = vmatpush1.msra.mxu0 0.0
    %942 = vmatprep.subr.mxu0 0.0
    %943 = vmatpush1.msra.mxu0 %v914
    %944 = vmatprep.subr.mxu0 0.0
    %945 = vmatpush1.msra.mxu0 %v913
    %946 = vmatprep.subr.mxu0 0.0
    %947 = vmatpush1.msra.mxu0 %v912
    %948 = vmatprep.subr.mxu0 0.0
    %949 = vmatpush1.msra.mxu0 %v911
    %950 = vmatprep.subr.mxu0 0.0
    %951 = vmatpush1.msra.mxu0 %v910
    %952 = vmatprep.subr.mxu0 0.0
    %953 = vmatpush1.msra.mxu0 %v909
    %954 = vmatprep.subr.mxu0 0.0
    %955 = vmatpush1.msra.mxu0 %v908
    %956 = vmatprep.subr.mxu0 0.0
    %957 = vmatpush1.msra.mxu0 %v907
    %958 = vmatprep.subr.mxu0 0.0
    %959 = vmatpush2.msra.mxu0 0.0
    %960 = vmatprep.subr.mxu0 0.0
    %961 = vmatpush2.msra.mxu0 0.0
    %962 = vmatprep.subr.mxu0 0.0
    %963 = vmatpush2.msra.mxu0 0.0
    %964 = vmatprep.subr.mxu0 0.0
    %965 = vmatpush2.msra.mxu0 0.0
    %966 = vmatprep.subr.mxu0 0.0
    %967 = vmatpush2.msra.mxu0 0.0
    %968 = vmatprep.subr.mxu0 0.0
    %969 = vmatpush2.msra.mxu0 0.0
    %970 = vmatprep.subr.mxu0 0.0
    %971 = vmatpush2.msra.mxu0 0.0
    %972 = vmatprep.subr.mxu0 0.0
    %973 = vmatpush2.msra.mxu0 0.0
    %974 = vmatprep.subr.mxu0 0.0
    %975 = vmatpush2.msra.mxu0 0.0
    %976 = vmatprep.subr.mxu0 0.0
    %977 = vmatpush2.msra.mxu0 0.0
    %978 = vmatprep.subr.mxu0 0.0
    %979 = vmatpush2.msra.mxu0 0.0
    %980 = vmatprep.subr.mxu0 0.0
    %981 = vmatpush2.msra.mxu0 0.0
    %982 = vmatprep.subr.mxu0 0.0
    %983 = vmatpush2.msra.mxu0 0.0
    %984 = vmatprep.subr.mxu0 0.0
    %985 = vmatpush2.msra.mxu0 0.0
    %986 = vmatprep.subr.mxu0 0.0
    %987 = vmatpush2.msra.mxu0 0.0
    %988 = vmatprep.subr.mxu0 0.0
    %989 = vmatpush2.msra.mxu0 0.0
    %990 = vmatprep.mubr.f32.mxu0 0.0
    %991 = vmatmul.mubr.f32.gmra.mxu0 %v921
    %v992 = vpop.f32.mrf.mxu0
    %v993 = vadd.f32 %v919, %v992
    %v994 = vpop.f32.mrf.mxu0
    %995 = vmatprep.mubr.f32.mxu0 0.0
    %996 = vmatmul.mubr.f32.gmra.mxu0 %v924
    %v997 = vpop.f32.mrf.mxu0
    %v998 = vadd.f32 %v919, %v997
    %v999 = vpop.f32.mrf.mxu0
    %1000 = vdwg.mxu0
    %v1001 = vadd.f32 %v591, %v993
    %v1002 = vadd.f32 %v592, %v998
    %v1003 = vld [vmem:[%s2 + $0x188] sm:$0x1]
    %v1004 = vld [vmem:[%s2 + $0x190] sm:$0x1]
    %v1005 = vsel %vm149, %v1001, 0.0
    %1006 = vadd.xlane.f32.xlu0 %v1005
    %v1007 = vpop.xlane.xlu0 %1006
    %v1008 = vsel %vm149, %v1002, 0.0
    %1009 = vadd.xlane.f32.xlu0 %v1008
    %v1010 = vpop.xlane.xlu0 %1009
    %v1011 = vmul.f32 %v1007, %v331
    %v1012 = vmul.f32 %v1010, %v331
    %v1013 = vsub.f32 %v1001, %v1011
    %v1014 = vsub.f32 %v1002, %v1012
    %v1015 = vmul.f32 %v1013, %v1013
    %v1016 = vmul.f32 %v1014, %v1014
    %v1017 = vsel %vm149, %v1015, 0.0
    %1018 = vadd.xlane.f32.xlu0 %v1017
    %v1019 = vpop.xlane.xlu0 %1018
    %v1020 = vsel %vm149, %v1016, 0.0
    %1021 = vadd.xlane.f32.xlu0 %v1020
    %v1022 = vpop.xlane.xlu0 %1021
    %v1023 = vmul.f32 %v1019, %v331
    %v1024 = vmul.f32 %v1022, %v331
    %v1025 = vadd.f32 %v1023, 1e-05
    %v1026 = vadd.f32 %v1024, 1e-05
    %v1027 = vrsqrt.pop %v1025
    %v1028 = vrsqrt.pop %v1026
    %v1029 = vmul.f32 %v1013, %v1027
    %v1030 = vmul.f32 %v1014, %v1028
    %v1031 = vlaneseq
    %v1032 = vshrl.u32 %v1031, 7
    %v1033 = vsub.s32 0, %v1032
    %v1034 = vrot.slane %v1003, %v1033
    %v1035 = vmul.f32 %v1029, %v1034
    %v1036 = vmul.f32 %v1030, %v1034
    %v1037 = vlaneseq
    %v1038 = vshrl.u32 %v1037, 7
    %v1039 = vsub.s32 0, %v1038
    %v1040 = vrot.slane %v1004, %v1039
    %v1041 = vadd.f32 %v1035, %v1040
    %v1042 = vadd.f32 %v1036, %v1040
    %v1043 = vld [vmem:[%s4] sm:$0xff]
    %v1044 = vld [vmem:[%s4 + $0x8] sm:$0xff]
    %v1045 = vld [vmem:[%s4 + $0x10] sm:$0xff]
    %v1046 = vld [vmem:[%s4 + $0x18] sm:$0xff]
    %v1047 = vld [vmem:[%s4 + $0x20] sm:$0x1]
    %v1048 = vlaneseq
    %v1049 = vshrl.u32 %v1048, 7
    %v1050 = vsub.s32 0, %v1049
    %v1051 = vrot.slane %v1047, %v1050
    %v1053 = vsel %vm149, %v1041, 0
    %v1056 = vsel %vm149, %v1042, 0
    %1058 = vmatprep.subr.mxu0 0.0
    %1059 = vmatpush1.msra.mxu0 0.0
    %1060 = vmatprep.subr.mxu0 0.0
    %1061 = vmatpush1.msra.mxu0 0.0
    %1062 = vmatprep.subr.mxu0 0.0
    %1063 = vmatpush1.msra.mxu0 0.0
    %1064 = vmatprep.subr.mxu0 0.0
    %1065 = vmatpush1.msra.mxu0 0.0
    %1066 = vmatprep.subr.mxu0 0.0
    %1067 = vmatpush1.msra.mxu0 0.0
    %1068 = vmatprep.subr.mxu0 0.0
    %1069 = vmatpush1.msra.mxu0 0.0
    %1070 = vmatprep.subr.mxu0 0.0
    %1071 = vmatpush1.msra.mxu0 0.0
    %1072 = vmatprep.subr.mxu0 0.0
    %1073 = vmatpush1.msra.mxu0 0.0
    %1074 = vmatprep.subr.mxu0 0.0
    %1075 = vmatpush1.msra.mxu0 0.0
    %1076 = vmatprep.subr.mxu0 0.0
    %1077 = vmatpush1.msra.mxu0 0.0
    %1078 = vmatprep.subr.mxu0 0.0
    %1079 = vmatpush1.msra.mxu0 0.0
    %1080 = vmatprep.subr.mxu0 0.0
    %1081 = vmatpush1.msra.mxu0 0.0
    %1082 = vmatprep.subr.mxu0 0.0
    %1083 = vmatpush1.msra.mxu0 %v1046
    %1084 = vmatprep.subr.mxu0 0.0
    %1085 = vmatpush1.msra.mxu0 %v1045
    %1086 = vmatprep.subr.mxu0 0.0
    %1087 = vmatpush1.msra.mxu0 %v1044
    %1088 = vmatprep.subr.mxu0 0.0
    %1089 = vmatpush1.msra.mxu0 %v1043
    %1090 = vmatprep.subr.mxu0 0.0
    %1091 = vmatpush2.msra.mxu0 0.0
    %1092 = vmatprep.subr.mxu0 0.0
    %1093 = vmatpush2.msra.mxu0 0.0
    %1094 = vmatprep.subr.mxu0 0.0
    %1095 = vmatpush2.msra.mxu0 0.0
    %1096 = vmatprep.subr.mxu0 0.0
    %1097 = vmatpush2.msra.mxu0 0.0
    %1098 = vmatprep.subr.mxu0 0.0
    %1099 = vmatpush2.msra.mxu0 0.0
    %1100 = vmatprep.subr.mxu0 0.0
    %1101 = vmatpush2.msra.mxu0 0.0
    %1102 = vmatprep.subr.mxu0 0.0
    %1103 = vmatpush2.msra.mxu0 0.0
    %1104 = vmatprep.subr.mxu0 0.0
    %1105 = vmatpush2.msra.mxu0 0.0
    %1106 = vmatprep.subr.mxu0 0.0
    %1107 = vmatpush2.msra.mxu0 0.0
    %1108 = vmatprep.subr.mxu0 0.0
    %1109 = vmatpush2.msra.mxu0 0.0
    %1110 = vmatprep.subr.mxu0 0.0
    %1111 = vmatpush2.msra.mxu0 0.0
    %1112 = vmatprep.subr.mxu0 0.0
    %1113 = vmatpush2.msra.mxu0 0.0
    %1114 = vmatprep.subr.mxu0 0.0
    %1115 = vmatpush2.msra.mxu0 0.0
    %1116 = vmatprep.subr.mxu0 0.0
    %1117 = vmatpush2.msra.mxu0 0.0
    %1118 = vmatprep.subr.mxu0 0.0
    %1119 = vmatpush2.msra.mxu0 0.0
    %1120 = vmatprep.subr.mxu0 0.0
    %1121 = vmatpush2.msra.mxu0 0.0
    %1122 = vmatprep.mubr.f32.mxu0 0.0
    %1123 = vmatmul.mubr.f32.gmra.mxu0 %v1053
    %v1124 = vpop.f32.mrf.mxu0
    %v1125 = vadd.f32 %v1051, %v1124
    %v1126 = vpop.f32.mrf.mxu0
    %1127 = vmatprep.mubr.f32.mxu0 0.0
    %1128 = vmatmul.mubr.f32.gmra.mxu0 %v1056
    %v1129 = vpop.f32.mrf.mxu0
    %v1130 = vadd.f32 %v1051, %v1129
    %v1131 = vpop.f32.mrf.mxu0
    %1132 = vdwg.mxu0
    %1133 = vst.msk [vmem:[#allocation2] sm:$0xff] %vm56, %v1125
    %1134 = vst.msk [vmem:[#allocation2 + $0x8] sm:$0xff] %vm56, %v1130
    // Predicated region
    $region22: #{tpu_custom_call.1} parent=1 // pred_check
      _
    $region23: #{tpu_custom_call.1} parent=1 // pred_check_branch
      %1136 = sbr.rel (0) target = $region25
    $region24: #{tpu_custom_call.1} parent=1 // pred_region
      %s1138 = ssub.s32 256, 256
      %1139 = vsyncadd [#allocation3], %s1138
      %s1140 = sshll.u32 [#allocation2], 4
      %s1141 = int_to_ptr.vmem [resolvable:$true] %s1140
      %1146 = dma.vmem_to_hbm [thread:$0]  %s1141, 256, %s5, [#allocation3], 128, 128, 8
    $region25: #{tpu_custom_call.1} parent=1 // pred_fallthru
      _
    // Predicated region
    $region26: #{tpu_custom_call.1} parent=1 // pred_check
      _
    $region27: #{tpu_custom_call.1} parent=1 // pred_check_branch
      %1148 = sbr.rel (0) target = $region29
    $region28: #{tpu_custom_call.1} parent=1 // pred_region
      %1149 = dma.done [#allocation3], 256
    $region29: #{tpu_custom_call.1} parent=1 // pred_fallthru
      _
    %1150 = vsyncpa [#allocation3], 1

</llo_original>
